<compile_context>
chip_gen: v7x
topology: tpu7x:2x2x1
jax: 0.10.0
libtpu: 0.0.40
codegen_flags: <defaults>
</compile_context>

<pallas_src>
import functools
import math

import jax
import jax.numpy as jnp
from jax import lax
from jax.experimental import pallas as pl
from jax.experimental.pallas import tpu as pltpu


# Scoped-VMEM request: big enough for the 1024-class projection tiles, small
# enough to stay inside v7x's 64 MiB physical VMEM (v5e/v6e have 128 MiB).
_VMEM_LIMIT = 48 * 1024 * 1024


# ---------------------------------------------------------------------------
# Tiling helpers
# ---------------------------------------------------------------------------
def _block_and_pad(dim: int, target: int, align: int):
    """Pick (block, padded_dim) for one matmul dimension.

    * dim <= target          -> full-dim block (always a legal BlockSpec block).
    * a large aligned divisor of dim exists close to target -> use it (no pad).
    * otherwise              -> use `target` and pad the dim up to a multiple
                                of it (never fall back to a huge full-dim block).
    """
    if dim <= target:
        return dim, dim
    t = (target // align) * align
    lo = max(align, t // 2)
    probe = t
    while probe >= lo:
        if dim % probe == 0:
            return probe, dim
        probe -= align
    return t, pl.cdiv(dim, t) * t


def _attn_tile(dim: int, target: int) -> int:
    """Largest 8-aligned divisor of `dim` that is <= target (or the full dim).

    Attention tiles must divide S exactly (zero-padding K/V columns would leak
    probability mass into padding), so we only pick exact divisors.
    """
    if dim <= target:
        return dim
    t = (min(target, dim) // 8) * 8
    while t >= 8:
        if dim % t == 0:
            return t
        t -= 8
    return dim  # S not a multiple of 8: full-dim block (rare; correct, may be large)


# ---------------------------------------------------------------------------
# Tiled linear:  out = x @ w + b     (x: (M,K), w: (K,N), b: (N,))
# ---------------------------------------------------------------------------
def _linear_kernel_f32(x_ref, w_ref, b_ref, o_ref):
    # f32 output: accumulate directly into the resident output block
    # (saves the (tm,tn) f32 scratch and one full VPU copy pass per tile).
    kk = pl.program_id(2)
    prod = jnp.dot(x_ref[...], w_ref[...], preferred_element_type=jnp.float32)

    @pl.when(kk == 0)
    def _():
        o_ref[...] = prod + b_ref[...]          # fold bias at the first K step

    @pl.when(kk != 0)
    def _():
        o_ref[...] += prod


def _linear_kernel_acc(x_ref, w_ref, b_ref, o_ref, acc_ref):
    # Non-f32 output (bf16 / fp8): keep an f32 VMEM accumulator, store once.
    kk = pl.program_id(2)

    @pl.when(kk == 0)
    def _():
        acc_ref[...] = jnp.zeros_like(acc_ref)

    acc_ref[...] += jnp.dot(x_ref[...], w_ref[...],
                            preferred_element_type=jnp.float32)

    @pl.when(kk == pl.num_programs(2) - 1)
    def _():
        o_ref[...] = (acc_ref[...] + b_ref[...].astype(jnp.float32)
                      ).astype(o_ref.dtype)


def pallas_linear(x2d, w, b, *, tm=1024, tn=1024, tk=512):
    """out = x2d @ w + b with MXU-friendly tiles.

    Defaults target the compute-bound regime on v5e/v7x and ~most of it on
    v6e (raise tm/tn to ~1536 on v6e if VMEM allows); footprint at the
    defaults is ~12-16 MiB with double buffering, safe on v7x's 64 MiB VMEM.
    """
    m, k = x2d.shape
    k2, n = w.shape
    assert k == k2 and b.shape == (n,)

    tm, mp = _block_and_pad(m, tm, 8)      # sublane-aligned
    tn, np_ = _block_and_pad(n, tn, 128)   # lane-dense output tiles
    tk, kp = _block_and_pad(k, tk, 128)

    # Zero-pad awkward shapes up to the tile. K-padding is zeros in both
    # operands (contributes nothing); M/N padding is sliced off the result.
    if mp != m or kp != k:
        x2d = jnp.pad(x2d, ((0, mp - m), (0, kp - k)))
    if kp != k or np_ != n:
        w = jnp.pad(w, ((0, kp - k), (0, np_ - n)))
    if np_ != n:
        b = jnp.pad(b, (0, np_ - n))

    out_is_f32 = x2d.dtype == jnp.float32
    kernel = _linear_kernel_f32 if out_is_f32 else _linear_kernel_acc
    scratch = [] if out_is_f32 else [pltpu.VMEM((tm, tn), jnp.float32)]

    grid = (mp // tm, np_ // tn, kp // tk)
    out = pl.pallas_call(
        kernel,
        out_shape=jax.ShapeDtypeStruct((mp, np_), x2d.dtype),
        grid_spec=pltpu.PrefetchScalarGridSpec(
            num_scalar_prefetch=0,
            grid=grid,
            in_specs=[
                pl.BlockSpec((tm, tk), lambda i, j, kk: (i, kk)),
                pl.BlockSpec((tk, tn), lambda i, j, kk: (kk, j)),
                pl.BlockSpec((1, tn), lambda i, j, kk: (0, j)),
            ],
            out_specs=pl.BlockSpec((tm, tn), lambda i, j, kk: (i, j)),
            scratch_shapes=scratch,
        ),
        compiler_params=pltpu.CompilerParams(
            dimension_semantics=("parallel", "parallel", "arbitrary"),
            vmem_limit_bytes=_VMEM_LIMIT,
        ),
    )(x2d, w, b.reshape(1, np_))

    if mp != m or np_ != n:
        out = out[:m, :n]
    return out


# ---------------------------------------------------------------------------
# Flash-style causal attention over (B*H, S, d_head)
# Triangular schedule: the step axis only enumerates (qi, ki) pairs at/below
# the causal diagonal (scalar-prefetched qi/ki/last maps drive the index_maps).
# ---------------------------------------------------------------------------
def _flash_attn_kernel(qi_ref, ki_ref, last_ref,        # scalar prefetch (SMEM)
                       q_ref, k_ref, v_ref, o_ref,      # tiles (VMEM)
                       m_sc, l_sc, acc_sc,              # scratch (VMEM)
                       *, sm_scale: float, approx_recip: bool):
    j = pl.program_id(1)
    qi = qi_ref[j]
    ki = ki_ref[j]
    tq = q_ref.shape[1]
    tkv = k_ref.shape[1]
    q_start = qi * tq
    kv_start = ki * tkv

    # First KV step of this query block: reset the online-softmax state.
    # (ki == 0 is always the first scheduled step for a q block, so every row
    #  sees column 0 first -> running max is finite after step 0 -> NaN-safe.)
    @pl.when(ki == 0)
    def _():
        m_sc[...] = jnp.full_like(m_sc, -jnp.inf)
        l_sc[...] = jnp.zeros_like(l_sc)
        acc_sc[...] = jnp.zeros_like(acc_sc)

    def scores():
        q = q_ref[0] * sm_scale          # fold 1/sqrt(d_head) into q, O(tq*dh)
        k = k_ref[0]
        # q @ k^T: contract last dims of both operands (no XLU transpose).
        return lax.dot_general(q, k, (((1,), (1,)), ((), ())),
                               preferred_element_type=jnp.float32)

    def update(s):
        v = v_ref[0]
        m_prev = m_sc[...]
        m_new = jnp.maximum(m_prev, jnp.max(s, axis=-1, keepdims=True))
        alpha = jnp.exp(m_prev - m_new)
        p = jnp.exp(s - m_new)                                   # f32
        l_sc[...] = alpha * l_sc[...] + jnp.sum(p, axis=-1, keepdims=True)
        acc_sc[...] = alpha * acc_sc[...] + lax.dot_general(
            p.astype(v.dtype), v, (((1,), (0,)), ((), ())),
            preferred_element_type=jnp.float32)
        m_sc[...] = m_new

    # Only blocks that straddle the diagonal need the iota/compare/where mask;
    # fully-below-diagonal blocks skip all mask VPU work.
    needs_mask = kv_start + tkv - 1 > q_start

    @pl.when(needs_mask)
    def _():
        s = scores()
        row = q_start + lax.broadcasted_iota(jnp.int32, (tq, tkv), 0)
        col = kv_start + lax.broadcasted_iota(jnp.int32, (tq, tkv), 1)
        update(jnp.where(col > row, -jnp.inf, s))

    @pl.when(jnp.logical_not(needs_mask))
    def _():
        update(scores())

    # Last KV step for this query block: normalize and store.
    @pl.when(last_ref[j] == 1)
    def _():
        inv_l = pl.reciprocal(l_sc[...], approx=approx_recip)
        o_ref[0] = (acc_sc[...] * inv_l).astype(o_ref.dtype)


def pallas_flash_attention(q, k, v, *, tq=256, tkv=512):
    # q, k, v: (B*H, S, d_head)
    bh, s, dh = q.shape
    tq = _attn_tile(s, tq)
    tkv = _attn_tile(s, tkv)
    nq = s // tq

    # Triangular schedule (host-side, trace time): for each query block the
    # KV blocks 0..last_valid (causally reachable) in ascending order.
    qi_list, ki_list, last_list = [], [], []
    for qi in range(nq):
        nk = (qi * tq + tq - 1) // tkv + 1
        for ki in range(nk):
            qi_list.append(qi)
            ki_list.append(ki)
            last_list.append(1 if ki == nk - 1 else 0)
    qi_map = jnp.asarray(qi_list, dtype=jnp.int32)
    ki_map = jnp.asarray(ki_list, dtype=jnp.int32)
    last_map = jnp.asarray(last_list, dtype=jnp.int32)
    n_steps = len(qi_list)

    sm_scale = 1.0 / math.sqrt(dh)
    # Exact reciprocal on the f32 path, EUP approx reciprocal on the bf16 path.
    approx_recip = q.dtype != jnp.float32
    kernel = functools.partial(_flash_attn_kernel, sm_scale=sm_scale,
                               approx_recip=approx_recip)

    q_spec = pl.BlockSpec((1, tq, dh),
                          lambda b, j, qi_m, ki_m, last_m: (b, qi_m[j], 0))
    kv_spec = pl.BlockSpec((1, tkv, dh),
                           lambda b, j, qi_m, ki_m, last_m: (b, ki_m[j], 0))

    # TODO(synk): with d_head < 128 the output store / acc scratch are
    # lane-sparse; landing attention output head-major into out_proj directly
    # (no HBM slab, no JAX transposes) needs d_head to be a 128 multiple.
    return pl.pallas_call(
        kernel,
        out_shape=jax.ShapeDtypeStruct((bh, s, dh), q.dtype),
        grid_spec=pltpu.PrefetchScalarGridSpec(
            num_scalar_prefetch=3,
            grid=(bh, n_steps),
            in_specs=[q_spec, kv_spec, kv_spec],
            out_specs=q_spec,
            scratch_shapes=[
                pltpu.VMEM((tq, 1), jnp.float32),    # running max  m
                pltpu.VMEM((tq, 1), jnp.float32),    # running sum  l
                pltpu.VMEM((tq, dh), jnp.float32),   # accumulator
            ],
        ),
        compiler_params=pltpu.CompilerParams(
            # bh "parallel" for the v7x megacore split; step axis is a
            # sequential online-softmax reduction -> "arbitrary".
            dimension_semantics=("parallel", "arbitrary"),
            vmem_limit_bytes=_VMEM_LIMIT,
        ),
    )(qi_map, ki_map, last_map, q, k, v)


# ---------------------------------------------------------------------------
# SelfAttention forward (causal_mask=True)
# ---------------------------------------------------------------------------
def self_attention_forward(x, params, n_heads):
    b, s, d = x.shape
    dh = d // n_heads
    dtype = x.dtype

    w_in = params["w_in"].astype(dtype)     # (3D, D)  PyTorch layout
    b_in = params["b_in"].astype(dtype)     # (3D,)
    w_out = params["w_out"].astype(dtype)   # (D, D)
    b_out = params["b_out"].astype(dtype)   # (D,)

    # in_proj: (B*S, D) @ (D, 3D) + b  (weight transposed once, outside kernel)
    qkv = pallas_linear(x.reshape(b * s, d), w_in.T, b_in)        # (B*S, 3D)

    # (B*S, 3D) -> 3 x (B*H, S, dh) with a single activation transpose.
    # TODO(synk): emit qkv head-major straight from in_proj and feed the
    # attention output head-indexed into out_proj to drop both XLA transposes
    # (needs d_head % 128 == 0 for lane-legal output blocks).
    qkv = qkv.reshape(b, s, 3, n_heads, dh).transpose(2, 0, 3, 1, 4)
    q = qkv[0].reshape(b * n_heads, s, dh)
    k = qkv[1].reshape(b * n_heads, s, dh)
    v = qkv[2].reshape(b * n_heads, s, dh)

    # fused causal flash attention
    o = pallas_flash_attention(q, k, v)                            # (B*H, S, dh)

    # (B*H, S, dh) -> (B*S, D)
    o = o.reshape(b, n_heads, s, dh).transpose(0, 2, 1, 3).reshape(b * s, d)

    # out_proj
    out = pallas_linear(o, w_out.T, b_out).reshape(b, s, d)
    return out


# ---------------------------------------------------------------------------
# Pure-JAX reference (mirrors the PyTorch module) for self-check
# ---------------------------------------------------------------------------
def reference_forward(x, params, n_heads):
    b, s, d = x.shape
    dh = d // n_heads
    qkv = x @ params["w_in"].T + params["b_in"]
    q, k, v = jnp.split(qkv, 3, axis=-1)
    q = q.reshape(b, s, n_heads, dh).transpose(0, 2, 1, 3)
    k = k.reshape(b, s, n_heads, dh).transpose(0, 2, 1, 3)
    v = v.reshape(b, s, n_heads, dh).transpose(0, 2, 1, 3)
    w = jnp.einsum("bhqd,bhkd->bhqk", q, k)
    mask = jnp.triu(jnp.ones((s, s), dtype=bool), k=1)
    w = jnp.where(mask, -jnp.inf, w) / math.sqrt(dh)
    w = jax.nn.softmax(w, axis=-1)
    o = jnp.einsum("bhqk,bhkd->bhqd", w, v)
    o = o.transpose(0, 2, 1, 3).reshape(b, s, d)
    return o @ params["w_out"].T + params["b_out"]


# ---------------------------------------------------------------------------
if __name__ == "__main__":
    B, S, D, H = 2, 8, 32, 4  # batch, seq, d_embed, n_heads

    key = jax.random.PRNGKey(0)
    kx, kw1, kb1, kw2, kb2 = jax.random.split(key, 5)

    bound = 1.0 / math.sqrt(D)
    params = {
        "w_in": jax.random.uniform(kw1, (3 * D, D), jnp.float32, -bound, bound),
        "b_in": jax.random.uniform(kb1, (3 * D,), jnp.float32, -bound, bound),
        "w_out": jax.random.uniform(kw2, (D, D), jnp.float32, -bound, bound),
        "b_out": jax.random.uniform(kb2, (D,), jnp.float32, -bound, bound),
    }
    x = jax.random.normal(kx, (B, S, D), jnp.float32)

    fwd = jax.jit(functools.partial(self_attention_forward, n_heads=H))
    ref = reference_forward(x, params, H)

    # f32 path (direct o_ref accumulation, exact reciprocal): tight tolerance
    out = jax.block_until_ready(fwd(x, params))
    assert out.shape == (B, S, D)
    assert jnp.allclose(out, ref, atol=1e-4, rtol=1e-4), "f32 mismatch vs reference"

    # bf16 MXU path (f32 accumulation inside kernels): loose tolerance
    out_bf16 = jax.block_until_ready(fwd(x.astype(jnp.bfloat16), params))
    assert jnp.allclose(out_bf16.astype(jnp.float32), ref, atol=5e-2, rtol=5e-2), \
        "bf16 mismatch vs reference"

    print("KERNEL_OK")
</pallas_src>

<mosaic_0001>
module attributes {stable_mosaic.version = 11 : i64} {
  func.func @_linear_kernel_f32(%arg0: i32, %arg1: i32, %arg2: i32, %arg3: memref<16x32xf32, #tpu.memory_space<vmem>>, %arg4: memref<32x96xf32, #tpu.memory_space<vmem>>, %arg5: memref<1x96xf32, #tpu.memory_space<vmem>>, %arg6: memref<16x96xf32, #tpu.memory_space<vmem>>) attributes {dimension_semantics = [#tpu.dimension_semantics<parallel>, #tpu.dimension_semantics<parallel>, #tpu.dimension_semantics<arbitrary>], iteration_bounds = array<i64: 1, 1, 1>, scalar_prefetch = 0 : i64, scratch_operands = 0 : i64, tpu.core_type = #tpu.core_type<tc>, window_params = [{transform_indices = @transform_0, window_bounds = array<i64: 16, 32>}, {transform_indices = @transform_1, window_bounds = array<i64: 32, 96>}, {transform_indices = @transform_2, window_bounds = array<i64: 1, 96>}, {transform_indices = @transform_3, window_bounds = array<i64: 16, 96>}]} {
    %c0 = arith.constant 0 : index
    %c0_0 = arith.constant 0 : index
    %0 = vector.load %arg3[%c0, %c0_0] : memref<16x32xf32, #tpu.memory_space<vmem>>, vector<16x32xf32>
    %c0_1 = arith.constant 0 : index
    %c0_2 = arith.constant 0 : index
    %1 = vector.load %arg4[%c0_1, %c0_2] : memref<32x96xf32, #tpu.memory_space<vmem>>, vector<32x96xf32>
    %cst = arith.constant dense<0.000000e+00> : vector<16x96xf32>
    %2 = tpu.matmul %0, %1, %cst {dimension_numbers = #tpu.dot_dimension_numbers<[1], [0], [0], [1], [0, 0, 1, 1], [], []>} : vector<16x32xf32>, vector<32x96xf32>, vector<16x96xf32> -> vector<16x96xf32>
    %c0_i32 = arith.constant 0 : i32
    %3 = arith.cmpi eq, %arg2, %c0_i32 : i32
    %4 = arith.extui %3 : i1 to i32
    %c0_i32_3 = arith.constant 0 : i32
    %5 = arith.cmpi ne, %4, %c0_i32_3 : i32
    scf.if %5 {
      %c0_6 = arith.constant 0 : index
      %c0_7 = arith.constant 0 : index
      %9 = vector.load %arg5[%c0_6, %c0_7] : memref<1x96xf32, #tpu.memory_space<vmem>>, vector<1x96xf32>
      %10 = vector.broadcast %9 : vector<1x96xf32> to vector<16x96xf32>
      %11 = arith.addf %2, %10 : vector<16x96xf32>
      %c0_8 = arith.constant 0 : index
      %c0_9 = arith.constant 0 : index
      %12 = vector.load %arg6[%c0_8, %c0_9] : memref<16x96xf32, #tpu.memory_space<vmem>>, vector<16x96xf32>
      tpu.vector_store %arg6[%c0_8, %c0_9], %11 {strides = array<i32>} : memref<16x96xf32, #tpu.memory_space<vmem>>, vector<16x96xf32>,
    } else {
    }
    %c0_i32_4 = arith.constant 0 : i32
    %6 = arith.cmpi ne, %arg2, %c0_i32_4 : i32
    %7 = arith.extui %6 : i1 to i32
    %c0_i32_5 = arith.constant 0 : i32
    %8 = arith.cmpi ne, %7, %c0_i32_5 : i32
    scf.if %8 {
      %c0_6 = arith.constant 0 : index
      %c0_7 = arith.constant 0 : index
      %9 = vector.load %arg6[%c0_6, %c0_7] : memref<16x96xf32, #tpu.memory_space<vmem>>, vector<16x96xf32>
      %10 = arith.addf %9, %2 : vector<16x96xf32>
      %c0_8 = arith.constant 0 : index
      %c0_9 = arith.constant 0 : index
      %11 = vector.load %arg6[%c0_8, %c0_9] : memref<16x96xf32, #tpu.memory_space<vmem>>, vector<16x96xf32>
      tpu.vector_store %arg6[%c0_8, %c0_9], %10 {strides = array<i32>} : memref<16x96xf32, #tpu.memory_space<vmem>>, vector<16x96xf32>,
    } else {
    }
    return
  }
  func.func @transform_0(%arg0: i32, %arg1: i32, %arg2: i32) -> (i32, i32) {
    %c0_i32 = arith.constant 0 : i32
    return %arg0, %arg2 : i32, i32
  }
  func.func @transform_1(%arg0: i32, %arg1: i32, %arg2: i32) -> (i32, i32) {
    %c0_i32 = arith.constant 0 : i32
    return %arg2, %arg1 : i32, i32
  }
  func.func @transform_2(%arg0: i32, %arg1: i32, %arg2: i32) -> (i32, i32) {
    %c0_i32 = arith.constant 0 : i32
    %c0_i32_0 = arith.constant 0 : i32
    return %c0_i32, %arg1 : i32, i32
  }
  func.func @transform_3(%arg0: i32, %arg1: i32, %arg2: i32) -> (i32, i32) {
    %c0_i32 = arith.constant 0 : i32
    return %arg0, %arg1 : i32, i32
  }
}

module attributes {stable_mosaic.version = 11 : i64} {
  func.func @_flash_attn_kernel(%arg0: i32, %arg1: i32, %arg2: memref<1xi32, #tpu.memory_space<smem>>, %arg3: memref<1xi32, #tpu.memory_space<smem>>, %arg4: memref<1xi32, #tpu.memory_space<smem>>, %arg5: memref<1x8x8xf32, #tpu.memory_space<vmem>>, %arg6: memref<1x8x8xf32, #tpu.memory_space<vmem>>, %arg7: memref<1x8x8xf32, #tpu.memory_space<vmem>>, %arg8: memref<1x8x8xf32, #tpu.memory_space<vmem>>, %arg9: memref<8x1xf32, #tpu.memory_space<vmem>>, %arg10: memref<8x1xf32, #tpu.memory_space<vmem>>, %arg11: memref<8x8xf32, #tpu.memory_space<vmem>>) attributes {dimension_semantics = [#tpu.dimension_semantics<parallel>, #tpu.dimension_semantics<arbitrary>], iteration_bounds = array<i64: 8, 1>, scalar_prefetch = 3 : i64, scratch_operands = 3 : i64, tpu.core_type = #tpu.core_type<tc>, window_params = [{transform_indices = @transform_0, window_bounds = array<i64: 1, 8, 8>}, {transform_indices = @transform_1, window_bounds = array<i64: 1, 8, 8>}, {transform_indices = @transform_2, window_bounds = array<i64: 1, 8, 8>}, {transform_indices = @transform_3, window_bounds = array<i64: 1, 8, 8>}]} {
    %0 = arith.index_cast %arg1 : i32 to index
    %1 = memref.load %arg2[%0] : memref<1xi32, #tpu.memory_space<smem>>
    %2 = arith.index_cast %arg1 : i32 to index
    %3 = memref.load %arg3[%2] : memref<1xi32, #tpu.memory_space<smem>>
    %c8_i32 = arith.constant 8 : i32
    %4 = arith.muli %1, %c8_i32 : i32
    %c8_i32_0 = arith.constant 8 : i32
    %5 = arith.muli %3, %c8_i32_0 : i32
    %c0_i32 = arith.constant 0 : i32
    %6 = arith.cmpi eq, %3, %c0_i32 : i32
    %7 = arith.extui %6 : i1 to i32
    %c0_i32_1 = arith.constant 0 : i32
    %8 = arith.cmpi ne, %7, %c0_i32_1 : i32
    scf.if %8 {
      %cst = arith.constant 0xFF800000 : f32
      %22 = vector.broadcast %cst : f32 to vector<8x1xf32>
      %c0 = arith.constant 0 : index
      %c0_7 = arith.constant 0 : index
      %23 = vector.load %arg9[%c0, %c0_7] : memref<8x1xf32, #tpu.memory_space<vmem>>, vector<8x1xf32>
      tpu.vector_store %arg9[%c0, %c0_7], %22 {strides = array<i32>} : memref<8x1xf32, #tpu.memory_space<vmem>>, vector<8x1xf32>,
      %cst_8 = arith.constant 0.000000e+00 : f32
      %24 = vector.broadcast %cst_8 : f32 to vector<8x1xf32>
      %c0_9 = arith.constant 0 : index
      %c0_10 = arith.constant 0 : index
      %25 = vector.load %arg10[%c0_9, %c0_10] : memref<8x1xf32, #tpu.memory_space<vmem>>, vector<8x1xf32>
      tpu.vector_store %arg10[%c0_9, %c0_10], %24 {strides = array<i32>} : memref<8x1xf32, #tpu.memory_space<vmem>>, vector<8x1xf32>,
      %cst_11 = arith.constant 0.000000e+00 : f32
      %26 = vector.broadcast %cst_11 : f32 to vector<8x8xf32>
      %c0_12 = arith.constant 0 : index
      %c0_13 = arith.constant 0 : index
      %27 = vector.load %arg11[%c0_12, %c0_13] : memref<8x8xf32, #tpu.memory_space<vmem>>, vector<8x8xf32>
      tpu.vector_store %arg11[%c0_12, %c0_13], %26 {strides = array<i32>} : memref<8x8xf32, #tpu.memory_space<vmem>>, vector<8x8xf32>,
    } else {
    }
    %c8_i32_2 = arith.constant 8 : i32
    %9 = arith.addi %5, %c8_i32_2 : i32
    %c1_i32 = arith.constant 1 : i32
    %10 = arith.subi %9, %c1_i32 : i32
    %11 = arith.cmpi sgt, %10, %4 : i32
    %12 = arith.extui %11 : i1 to i32
    %c0_i32_3 = arith.constant 0 : i32
    %13 = arith.cmpi ne, %12, %c0_i32_3 : i32
    scf.if %13 {
      %c0 = arith.constant 0 : index
      %c0_7 = arith.constant 0 : index
      %c0_8 = arith.constant 0 : index
      %22 = vector.load %arg5[%c0, %c0_7, %c0_8] : memref<1x8x8xf32, #tpu.memory_space<vmem>>, vector<1x8x8xf32>
      %23 = vector.shape_cast %22 : vector<1x8x8xf32> to vector<8x8xf32>
      %cst = arith.constant 0.353553385 : f32
      %24 = vector.broadcast %cst : f32 to vector<8x8xf32>
      %25 = arith.mulf %23, %24 : vector<8x8xf32>
      %c0_9 = arith.constant 0 : index
      %c0_10 = arith.constant 0 : index
      %c0_11 = arith.constant 0 : index
      %26 = vector.load %arg6[%c0_9, %c0_10, %c0_11] : memref<1x8x8xf32, #tpu.memory_space<vmem>>, vector<1x8x8xf32>
      %27 = vector.shape_cast %26 : vector<1x8x8xf32> to vector<8x8xf32>
      %cst_12 = arith.constant dense<0.000000e+00> : vector<8x8xf32>
      %28 = tpu.matmul %25, %27, %cst_12 {dimension_numbers = #tpu.dot_dimension_numbers<[1], [1], [0], [0], [0, 0, 1, 0], [], []>} : vector<8x8xf32>, vector<8x8xf32>, vector<8x8xf32> -> vector<8x8xf32>
      %29 = tpu.iota {dimensions = array<i32: 0>} : vector<8x8xi32>
      %30 = vector.broadcast %4 : i32 to vector<8x8xi32>
      %31 = arith.addi %30, %29 : vector<8x8xi32>
      %32 = tpu.iota {dimensions = array<i32: 1>} : vector<8x8xi32>
      %33 = vector.broadcast %5 : i32 to vector<8x8xi32>
      %34 = arith.addi %33, %32 : vector<8x8xi32>
      %35 = arith.cmpi sgt, %34, %31 : vector<8x8xi32>
      %cst_13 = arith.constant 0xFF800000 : f32
      %36 = vector.broadcast %cst_13 : f32 to vector<8x8xf32>
      %37 = arith.select %35, %36, %28 : vector<8x8xi1>, vector<8x8xf32>
      %c0_14 = arith.constant 0 : index
      %c0_15 = arith.constant 0 : index
      %c0_16 = arith.constant 0 : index
      %38 = vector.load %arg7[%c0_14, %c0_15, %c0_16] : memref<1x8x8xf32, #tpu.memory_space<vmem>>, vector<1x8x8xf32>
      %39 = vector.shape_cast %38 : vector<1x8x8xf32> to vector<8x8xf32>
      %c0_17 = arith.constant 0 : index
      %c0_18 = arith.constant 0 : index
      %40 = vector.load %arg9[%c0_17, %c0_18] : memref<8x1xf32, #tpu.memory_space<vmem>>, vector<8x1xf32>
      %cst_19 = arith.constant dense<0xFF800000> : vector<8xf32>
      %41 = vector.multi_reduction <maximumf>, %37, %cst_19 [1] : vector<8x8xf32> to vector<8xf32>
      %42 = vector.shape_cast %41 : vector<8xf32> to vector<8x1xf32>
      %43 = arith.maximumf %40, %42 : vector<8x1xf32>
      %44 = arith.subf %40, %43 : vector<8x1xf32>
      %45 = math.exp %44 : vector<8x1xf32>
      %46 = vector.broadcast %43 : vector<8x1xf32> to vector<8x8xf32>
      %47 = arith.subf %37, %46 : vector<8x8xf32>
      %48 = math.exp %47 : vector<8x8xf32>
      %c0_20 = arith.constant 0 : index
      %c0_21 = arith.constant 0 : index
      %49 = vector.load %arg10[%c0_20, %c0_21] : memref<8x1xf32, #tpu.memory_space<vmem>>, vector<8x1xf32>
      %50 = arith.mulf %45, %49 : vector<8x1xf32>
      %cst_22 = arith.constant dense<0.000000e+00> : vector<8xf32>
      %51 = vector.multi_reduction <add>, %48, %cst_22 [1] : vector<8x8xf32> to vector<8xf32>
      %52 = vector.shape_cast %51 : vector<8xf32> to vector<8x1xf32>
      %53 = arith.addf %50, %52 : vector<8x1xf32>
      %c0_23 = arith.constant 0 : index
      %c0_24 = arith.constant 0 : index
      %54 = vector.load %arg10[%c0_23, %c0_24] : memref<8x1xf32, #tpu.memory_space<vmem>>, vector<8x1xf32>
      tpu.vector_store %arg10[%c0_23, %c0_24], %53 {strides = array<i32>} : memref<8x1xf32, #tpu.memory_space<vmem>>, vector<8x1xf32>,
      %c0_25 = arith.constant 0 : index
      %c0_26 = arith.constant 0 : index
      %55 = vector.load %arg11[%c0_25, %c0_26] : memref<8x8xf32, #tpu.memory_space<vmem>>, vector<8x8xf32>
      %56 = vector.broadcast %45 : vector<8x1xf32> to vector<8x8xf32>
      %57 = arith.mulf %56, %55 : vector<8x8xf32>
      %cst_27 = arith.constant dense<0.000000e+00> : vector<8x8xf32>
      %58 = tpu.matmul %48, %39, %cst_27 {dimension_numbers = #tpu.dot_dimension_numbers<[1], [0], [0], [1], [0, 0, 1, 1], [], []>} : vector<8x8xf32>, vector<8x8xf32>, vector<8x8xf32> -> vector<8x8xf32>
      %59 = arith.addf %57, %58 : vector<8x8xf32>
      %c0_28 = arith.constant 0 : index
      %c0_29 = arith.constant 0 : index
      %60 = vector.load %arg11[%c0_28, %c0_29] : memref<8x8xf32, #tpu.memory_space<vmem>>, vector<8x8xf32>
      tpu.vector_store %arg11[%c0_28, %c0_29], %59 {strides = array<i32>} : memref<8x8xf32, #tpu.memory_space<vmem>>, vector<8x8xf32>,
      %c0_30 = arith.constant 0 : index
      %c0_31 = arith.constant 0 : index
      %61 = vector.load %arg9[%c0_30, %c0_31] : memref<8x1xf32, #tpu.memory_space<vmem>>, vector<8x1xf32>
      tpu.vector_store %arg9[%c0_30, %c0_31], %43 {strides = array<i32>} : memref<8x1xf32, #tpu.memory_space<vmem>>, vector<8x1xf32>,
    } else {
    }
    %true = arith.constant true
    %14 = arith.xori %11, %true : i1
    %15 = arith.extui %14 : i1 to i32
    %c0_i32_4 = arith.constant 0 : i32
    %16 = arith.cmpi ne, %15, %c0_i32_4 : i32
    scf.if %16 {
      %c0 = arith.constant 0 : index
      %c0_7 = arith.constant 0 : index
      %c0_8 = arith.constant 0 : index
      %22 = vector.load %arg5[%c0, %c0_7, %c0_8] : memref<1x8x8xf32, #tpu.memory_space<vmem>>, vector<1x8x8xf32>
      %23 = vector.shape_cast %22 : vector<1x8x8xf32> to vector<8x8xf32>
      %cst = arith.constant 0.353553385 : f32
      %24 = vector.broadcast %cst : f32 to vector<8x8xf32>
      %25 = arith.mulf %23, %24 : vector<8x8xf32>
      %c0_9 = arith.constant 0 : index
      %c0_10 = arith.constant 0 : index
      %c0_11 = arith.constant 0 : index
      %26 = vector.load %arg6[%c0_9, %c0_10, %c0_11] : memref<1x8x8xf32, #tpu.memory_space<vmem>>, vector<1x8x8xf32>
      %27 = vector.shape_cast %26 : vector<1x8x8xf32> to vector<8x8xf32>
      %cst_12 = arith.constant dense<0.000000e+00> : vector<8x8xf32>
      %28 = tpu.matmul %25, %27, %cst_12 {dimension_numbers = #tpu.dot_dimension_numbers<[1], [1], [0], [0], [0, 0, 1, 0], [], []>} : vector<8x8xf32>, vector<8x8xf32>, vector<8x8xf32> -> vector<8x8xf32>
      %c0_13 = arith.constant 0 : index
      %c0_14 = arith.constant 0 : index
      %c0_15 = arith.constant 0 : index
      %29 = vector.load %arg7[%c0_13, %c0_14, %c0_15] : memref<1x8x8xf32, #tpu.memory_space<vmem>>, vector<1x8x8xf32>
      %30 = vector.shape_cast %29 : vector<1x8x8xf32> to vector<8x8xf32>
      %c0_16 = arith.constant 0 : index
      %c0_17 = arith.constant 0 : index
      %31 = vector.load %arg9[%c0_16, %c0_17] : memref<8x1xf32, #tpu.memory_space<vmem>>, vector<8x1xf32>
      %cst_18 = arith.constant dense<0xFF800000> : vector<8xf32>
      %32 = vector.multi_reduction <maximumf>, %28, %cst_18 [1] : vector<8x8xf32> to vector<8xf32>
      %33 = vector.shape_cast %32 : vector<8xf32> to vector<8x1xf32>
      %34 = arith.maximumf %31, %33 : vector<8x1xf32>
      %35 = arith.subf %31, %34 : vector<8x1xf32>
      %36 = math.exp %35 : vector<8x1xf32>
      %37 = vector.broadcast %34 : vector<8x1xf32> to vector<8x8xf32>
      %38 = arith.subf %28, %37 : vector<8x8xf32>
      %39 = math.exp %38 : vector<8x8xf32>
      %c0_19 = arith.constant 0 : index
      %c0_20 = arith.constant 0 : index
      %40 = vector.load %arg10[%c0_19, %c0_20] : memref<8x1xf32, #tpu.memory_space<vmem>>, vector<8x1xf32>
      %41 = arith.mulf %36, %40 : vector<8x1xf32>
      %cst_21 = arith.constant dense<0.000000e+00> : vector<8xf32>
      %42 = vector.multi_reduction <add>, %39, %cst_21 [1] : vector<8x8xf32> to vector<8xf32>
      %43 = vector.shape_cast %42 : vector<8xf32> to vector<8x1xf32>
      %44 = arith.addf %41, %43 : vector<8x1xf32>
      %c0_22 = arith.constant 0 : index
      %c0_23 = arith.constant 0 : index
      %45 = vector.load %arg10[%c0_22, %c0_23] : memref<8x1xf32, #tpu.memory_space<vmem>>, vector<8x1xf32>
      tpu.vector_store %arg10[%c0_22, %c0_23], %44 {strides = array<i32>} : memref<8x1xf32, #tpu.memory_space<vmem>>, vector<8x1xf32>,
      %c0_24 = arith.constant 0 : index
      %c0_25 = arith.constant 0 : index
      %46 = vector.load %arg11[%c0_24, %c0_25] : memref<8x8xf32, #tpu.memory_space<vmem>>, vector<8x8xf32>
      %47 = vector.broadcast %36 : vector<8x1xf32> to vector<8x8xf32>
      %48 = arith.mulf %47, %46 : vector<8x8xf32>
      %cst_26 = arith.constant dense<0.000000e+00> : vector<8x8xf32>
      %49 = tpu.matmul %39, %30, %cst_26 {dimension_numbers = #tpu.dot_dimension_numbers<[1], [0], [0], [1], [0, 0, 1, 1], [], []>} : vector<8x8xf32>, vector<8x8xf32>, vector<8x8xf32> -> vector<8x8xf32>
      %50 = arith.addf %48, %49 : vector<8x8xf32>
      %c0_27 = arith.constant 0 : index
      %c0_28 = arith.constant 0 : index
      %51 = vector.load %arg11[%c0_27, %c0_28] : memref<8x8xf32, #tpu.memory_space<vmem>>, vector<8x8xf32>
      tpu.vector_store %arg11[%c0_27, %c0_28], %50 {strides = array<i32>} : memref<8x8xf32, #tpu.memory_space<vmem>>, vector<8x8xf32>,
      %c0_29 = arith.constant 0 : index
      %c0_30 = arith.constant 0 : index
      %52 = vector.load %arg9[%c0_29, %c0_30] : memref<8x1xf32, #tpu.memory_space<vmem>>, vector<8x1xf32>
      tpu.vector_store %arg9[%c0_29, %c0_30], %34 {strides = array<i32>} : memref<8x1xf32, #tpu.memory_space<vmem>>, vector<8x1xf32>,
    } else {
    }
    %17 = arith.index_cast %arg1 : i32 to index
    %18 = memref.load %arg4[%17] : memref<1xi32, #tpu.memory_space<smem>>
    %c1_i32_5 = arith.constant 1 : i32
    %19 = arith.cmpi eq, %18, %c1_i32_5 : i32
    %20 = arith.extui %19 : i1 to i32
    %c0_i32_6 = arith.constant 0 : i32
    %21 = arith.cmpi ne, %20, %c0_i32_6 : i32
    scf.if %21 {
      %c0 = arith.constant 0 : index
      %c0_7 = arith.constant 0 : index
      %22 = vector.load %arg10[%c0, %c0_7] : memref<8x1xf32, #tpu.memory_space<vmem>>, vector<8x1xf32>
      %23 = tpu.reciprocal %22 : vector<8x1xf32> -> vector<8x1xf32>
      %c0_8 = arith.constant 0 : index
      %c0_9 = arith.constant 0 : index
      %24 = vector.load %arg11[%c0_8, %c0_9] : memref<8x8xf32, #tpu.memory_space<vmem>>, vector<8x8xf32>
      %25 = vector.broadcast %23 : vector<8x1xf32> to vector<8x8xf32>
      %26 = arith.mulf %24, %25 : vector<8x8xf32>
      %c0_10 = arith.constant 0 : index
      %c0_11 = arith.constant 0 : index
      %c0_12 = arith.constant 0 : index
      %27 = vector.load %arg8[%c0_10, %c0_11, %c0_12] : memref<1x8x8xf32, #tpu.memory_space<vmem>>, vector<1x8x8xf32>
      %28 = vector.shape_cast %27 : vector<1x8x8xf32> to vector<8x8xf32>
      %29 = vector.shape_cast %26 : vector<8x8xf32> to vector<1x8x8xf32>
      tpu.vector_store %arg8[%c0_10, %c0_11, %c0_12], %29 {strides = array<i32>} : memref<1x8x8xf32, #tpu.memory_space<vmem>>, vector<1x8x8xf32>,
    } else {
    }
    return
  }
  func.func @transform_0(%arg0: i32, %arg1: i32, %arg2: memref<1xi32, #tpu.memory_space<smem>>, %arg3: memref<1xi32, #tpu.memory_space<smem>>, %arg4: memref<1xi32, #tpu.memory_space<smem>>) -> (i32, i32, i32) {
    %0 = arith.index_cast %arg1 : i32 to index
    %1 = memref.load %arg2[%0] : memref<1xi32, #tpu.memory_space<smem>>
    %c0_i32 = arith.constant 0 : i32
    %c0_i32_0 = arith.constant 0 : i32
    return %arg0, %1, %c0_i32 : i32, i32, i32
  }
  func.func @transform_1(%arg0: i32, %arg1: i32, %arg2: memref<1xi32, #tpu.memory_space<smem>>, %arg3: memref<1xi32, #tpu.memory_space<smem>>, %arg4: memref<1xi32, #tpu.memory_space<smem>>) -> (i32, i32, i32) {
    %0 = arith.index_cast %arg1 : i32 to index
    %1 = memref.load %arg3[%0] : memref<1xi32, #tpu.memory_space<smem>>
    %c0_i32 = arith.constant 0 : i32
    %c0_i32_0 = arith.constant 0 : i32
    return %arg0, %1, %c0_i32 : i32, i32, i32
  }
  func.func @transform_2(%arg0: i32, %arg1: i32, %arg2: memref<1xi32, #tpu.memory_space<smem>>, %arg3: memref<1xi32, #tpu.memory_space<smem>>, %arg4: memref<1xi32, #tpu.memory_space<smem>>) -> (i32, i32, i32) {
    %0 = arith.index_cast %arg1 : i32 to index
    %1 = memref.load %arg3[%0] : memref<1xi32, #tpu.memory_space<smem>>
    %c0_i32 = arith.constant 0 : i32
    %c0_i32_0 = arith.constant 0 : i32
    return %arg0, %1, %c0_i32 : i32, i32, i32
  }
  func.func @transform_3(%arg0: i32, %arg1: i32, %arg2: memref<1xi32, #tpu.memory_space<smem>>, %arg3: memref<1xi32, #tpu.memory_space<smem>>, %arg4: memref<1xi32, #tpu.memory_space<smem>>) -> (i32, i32, i32) {
    %0 = arith.index_cast %arg1 : i32 to index
    %1 = memref.load %arg2[%0] : memref<1xi32, #tpu.memory_space<smem>>
    %c0_i32 = arith.constant 0 : i32
    %c0_i32_0 = arith.constant 0 : i32
    return %arg0, %1, %c0_i32 : i32, i32, i32
  }
}

module attributes {stable_mosaic.version = 11 : i64} {
  func.func @_linear_kernel_f32(%arg0: i32, %arg1: i32, %arg2: i32, %arg3: memref<16x32xf32, #tpu.memory_space<vmem>>, %arg4: memref<32x32xf32, #tpu.memory_space<vmem>>, %arg5: memref<1x32xf32, #tpu.memory_space<vmem>>, %arg6: memref<16x32xf32, #tpu.memory_space<vmem>>) attributes {dimension_semantics = [#tpu.dimension_semantics<parallel>, #tpu.dimension_semantics<parallel>, #tpu.dimension_semantics<arbitrary>], iteration_bounds = array<i64: 1, 1, 1>, scalar_prefetch = 0 : i64, scratch_operands = 0 : i64, tpu.core_type = #tpu.core_type<tc>, window_params = [{transform_indices = @transform_0, window_bounds = array<i64: 16, 32>}, {transform_indices = @transform_1, window_bounds = array<i64: 32, 32>}, {transform_indices = @transform_2, window_bounds = array<i64: 1, 32>}, {transform_indices = @transform_3, window_bounds = array<i64: 16, 32>}]} {
    %c0 = arith.constant 0 : index
    %c0_0 = arith.constant 0 : index
    %0 = vector.load %arg3[%c0, %c0_0] : memref<16x32xf32, #tpu.memory_space<vmem>>, vector<16x32xf32>
    %c0_1 = arith.constant 0 : index
    %c0_2 = arith.constant 0 : index
    %1 = vector.load %arg4[%c0_1, %c0_2] : memref<32x32xf32, #tpu.memory_space<vmem>>, vector<32x32xf32>
    %cst = arith.constant dense<0.000000e+00> : vector<16x32xf32>
    %2 = tpu.matmul %0, %1, %cst {dimension_numbers = #tpu.dot_dimension_numbers<[1], [0], [0], [1], [0, 0, 1, 1], [], []>} : vector<16x32xf32>, vector<32x32xf32>, vector<16x32xf32> -> vector<16x32xf32>
    %c0_i32 = arith.constant 0 : i32
    %3 = arith.cmpi eq, %arg2, %c0_i32 : i32
    %4 = arith.extui %3 : i1 to i32
    %c0_i32_3 = arith.constant 0 : i32
    %5 = arith.cmpi ne, %4, %c0_i32_3 : i32
    scf.if %5 {
      %c0_6 = arith.constant 0 : index
      %c0_7 = arith.constant 0 : index
      %9 = vector.load %arg5[%c0_6, %c0_7] : memref<1x32xf32, #tpu.memory_space<vmem>>, vector<1x32xf32>
      %10 = vector.broadcast %9 : vector<1x32xf32> to vector<16x32xf32>
      %11 = arith.addf %2, %10 : vector<16x32xf32>
      %c0_8 = arith.constant 0 : index
      %c0_9 = arith.constant 0 : index
      %12 = vector.load %arg6[%c0_8, %c0_9] : memref<16x32xf32, #tpu.memory_space<vmem>>, vector<16x32xf32>
      tpu.vector_store %arg6[%c0_8, %c0_9], %11 {strides = array<i32>} : memref<16x32xf32, #tpu.memory_space<vmem>>, vector<16x32xf32>,
    } else {
    }
    %c0_i32_4 = arith.constant 0 : i32
    %6 = arith.cmpi ne, %arg2, %c0_i32_4 : i32
    %7 = arith.extui %6 : i1 to i32
    %c0_i32_5 = arith.constant 0 : i32
    %8 = arith.cmpi ne, %7, %c0_i32_5 : i32
    scf.if %8 {
      %c0_6 = arith.constant 0 : index
      %c0_7 = arith.constant 0 : index
      %9 = vector.load %arg6[%c0_6, %c0_7] : memref<16x32xf32, #tpu.memory_space<vmem>>, vector<16x32xf32>
      %10 = arith.addf %9, %2 : vector<16x32xf32>
      %c0_8 = arith.constant 0 : index
      %c0_9 = arith.constant 0 : index
      %11 = vector.load %arg6[%c0_8, %c0_9] : memref<16x32xf32, #tpu.memory_space<vmem>>, vector<16x32xf32>
      tpu.vector_store %arg6[%c0_8, %c0_9], %10 {strides = array<i32>} : memref<16x32xf32, #tpu.memory_space<vmem>>, vector<16x32xf32>,
    } else {
    }
    return
  }
  func.func @transform_0(%arg0: i32, %arg1: i32, %arg2: i32) -> (i32, i32) {
    %c0_i32 = arith.constant 0 : i32
    return %arg0, %arg2 : i32, i32
  }
  func.func @transform_1(%arg0: i32, %arg1: i32, %arg2: i32) -> (i32, i32) {
    %c0_i32 = arith.constant 0 : i32
    return %arg2, %arg1 : i32, i32
  }
  func.func @transform_2(%arg0: i32, %arg1: i32, %arg2: i32) -> (i32, i32) {
    %c0_i32 = arith.constant 0 : i32
    %c0_i32_0 = arith.constant 0 : i32
    return %c0_i32, %arg1 : i32, i32
  }
  func.func @transform_3(%arg0: i32, %arg1: i32, %arg2: i32) -> (i32, i32) {
    %c0_i32 = arith.constant 0 : i32
    return %arg0, %arg1 : i32, i32
  }
}

</mosaic_0001>

<llo_original>
// kernel: self_attention_forward.3
$region0: #{self_attention_forward.3}
  #allocation0 [shape = 'u32[]', space=smem, size = 0x4, offset = 0x4, fixed_abs, tag = 'smem constant byte address 0x4 - core index']
  #allocation1 [shape = 'u32[144,128]{1,0:T(1,128)}', space=vmem, size = 0x12000, scoped, tag = 'internal scratch']
  %s0 = inlined_call_operand.vmem [shape: f32[16,32], index: 0, kind: input, shape index: {}]
  %s1 = inlined_call_operand.hbm [shape: f32[32,96], index: 1, kind: input, shape index: {}]
  %s2 = inlined_call_operand.vmem [shape: f32[1,96], index: 2, kind: input, shape index: {}]
  %s3 = inlined_call_operand.vmem [shape: f32[16,96], index: 3, kind: output, shape index: {}]
  %s4 = sld [smem:[#allocation0]]
  $region34: #{self_attention_forward.3} parent=0
    _
  %s6 = ssub.s32 1, %s4
  %s7 = scalar_select 0, %s6, %s4
  $region1: #{self_attention_forward.3} parent=0
    #allocation2 [shape = 'u8[16384]{0}', space=vmem, size = 0x4000, scoped, tag = 'input window, operand 1, single buffered']
    #allocation3 [shape = 's32[1]{0}', space=sflag, size = 0x4, scoped, tag = 'scoped memory for self_attention_forward.3']
    %8 = vsyncpa [#allocation3], 0
    // Predicated region
    $region2: #{self_attention_forward.3} parent=1 // pred_check
      _
    $region3: #{self_attention_forward.3} parent=1 // pred_check_branch
      %10 = sbr.rel (0) target = $region5
    $region4: #{self_attention_forward.3} parent=1 // pred_region
      _
    $region5: #{self_attention_forward.3} parent=1 // pred_fallthru
      _
    // Predicated region
    $region6: #{self_attention_forward.3} parent=1 // pred_check
      _
    $region7: #{self_attention_forward.3} parent=1 // pred_check_branch
      %12 = sbr.rel (0) target = $region9
    $region8: #{self_attention_forward.3} parent=1 // pred_region
      %s14 = ssub.s32 512, 512
      %15 = vsyncadd [#allocation3], %s14
      %s16 = sshll.u32 [#allocation2], 4
      %s17 = int_to_ptr.vmem [resolvable:$true] %s16
      %22 = dma.hbm_to_vmem [thread:$0]  %s1, 512, %s17, [#allocation3], 128, 128, 8
    $region9: #{self_attention_forward.3} parent=1 // pred_fallthru
      _
    // Predicated region
    $region10: #{self_attention_forward.3} parent=1 // pred_check
      _
    $region11: #{self_attention_forward.3} parent=1 // pred_check_branch
      %24 = sbr.rel (0) target = $region13
    $region12: #{self_attention_forward.3} parent=1 // pred_region
      _
    $region13: #{self_attention_forward.3} parent=1 // pred_fallthru
      _
    // Predicated region
    $region14: #{self_attention_forward.3} parent=1 // pred_check
      _
    $region15: #{self_attention_forward.3} parent=1 // pred_check_branch
      %26 = sbr.rel (0) target = $region17
    $region16: #{self_attention_forward.3} parent=1 // pred_region
      %27 = dma.done [#allocation3], 512
    $region17: #{self_attention_forward.3} parent=1 // pred_fallthru
      _
    %v28 = vld [vmem:[%s0] sm:$0xff]
    %v29 = vld [vmem:[%s0 + $0x8] sm:$0xff]
    %v30 = vld [vmem:[#allocation2] sm:$0xff]
    %v31 = vld [vmem:[#allocation2 + $0x8] sm:$0xff]
    %v32 = vld [vmem:[#allocation2 + $0x10] sm:$0xff]
    %v33 = vld [vmem:[#allocation2 + $0x18] sm:$0xff]
    %vm34 = vcmask 261120
    %v36 = vsel %vm34, %v28, 0
    %v39 = vsel %vm34, %v29, 0
    %41 = vmatprep.subr.mxu0 0.0
    %42 = vmatpush1.msra.mxu0 %v30
    %43 = vmatprep.subr.mxu0 0.0
    %44 = vmatpush1.msra.mxu0 %v31
    %45 = vmatprep.subr.mxu0 0.0
    %46 = vmatpush1.msra.mxu0 %v32
    %47 = vmatprep.subr.mxu0 0.0
    %48 = vmatpush1.msra.mxu0 %v33
    %49 = vmatprep.subr.mxu0 0.0
    %50 = vmatpush1.msra.mxu0 0.0
    %51 = vmatprep.subr.mxu0 0.0
    %52 = vmatpush1.msra.mxu0 0.0
    %53 = vmatprep.subr.mxu0 0.0
    %54 = vmatpush1.msra.mxu0 0.0
    %55 = vmatprep.subr.mxu0 0.0
    %56 = vmatpush1.msra.mxu0 0.0
    %57 = vmatprep.subr.mxu0 0.0
    %58 = vmatpush1.msra.mxu0 0.0
    %59 = vmatprep.subr.mxu0 0.0
    %60 = vmatpush1.msra.mxu0 0.0
    %61 = vmatprep.subr.mxu0 0.0
    %62 = vmatpush1.msra.mxu0 0.0
    %63 = vmatprep.subr.mxu0 0.0
    %64 = vmatpush1.msra.mxu0 0.0
    %65 = vmatprep.subr.mxu0 0.0
    %66 = vmatpush1.msra.mxu0 0.0
    %67 = vmatprep.subr.mxu0 0.0
    %68 = vmatpush1.msra.mxu0 0.0
    %69 = vmatprep.subr.mxu0 0.0
    %70 = vmatpush1.msra.mxu0 0.0
    %71 = vmatprep.subr.mxu0 0.0
    %72 = vmatpush1.msra.mxu0 0.0
    %73 = vmatprep.subr.mxu0 0.0
    %74 = vmatpush1.msra.mxu0 0.0
    %75 = vmatprep.subr.mxu0 0.0
    %76 = vmatpush1.msra.mxu0 0.0
    %77 = vmatprep.subr.mxu0 0.0
    %78 = vmatpush1.msra.mxu0 0.0
    %79 = vmatprep.subr.mxu0 0.0
    %80 = vmatpush1.msra.mxu0 0.0
    %81 = vmatprep.subr.mxu0 0.0
    %82 = vmatpush1.msra.mxu0 0.0
    %83 = vmatprep.subr.mxu0 0.0
    %84 = vmatpush1.msra.mxu0 0.0
    %85 = vmatprep.subr.mxu0 0.0
    %86 = vmatpush1.msra.mxu0 0.0
    %87 = vmatprep.subr.mxu0 0.0
    %88 = vmatpush1.msra.mxu0 0.0
    %89 = vmatprep.subr.mxu0 0.0
    %90 = vmatpush1.msra.mxu0 0.0
    %91 = vmatprep.subr.mxu0 0.0
    %92 = vmatpush1.msra.mxu0 0.0
    %93 = vmatprep.subr.mxu0 0.0
    %94 = vmatpush1.msra.mxu0 0.0
    %95 = vmatprep.subr.mxu0 0.0
    %96 = vmatpush1.msra.mxu0 0.0
    %97 = vmatprep.subr.mxu0 0.0
    %98 = vmatpush1.msra.mxu0 0.0
    %99 = vmatprep.subr.mxu0 0.0
    %100 = vmatpush1.msra.mxu0 0.0
    %101 = vmatprep.subr.mxu0 0.0
    %102 = vmatpush1.msra.mxu0 0.0
    %103 = vmatprep.subr.mxu0 0.0
    %104 = vmatpush1.msra.mxu0 0.0
    %105 = vmatprep.mubr.f32.mxu0 0.0
    %106 = vmatmul.mubr.f32.gmra.mrb[0].mxu0 %v36
    %v107 = vpop.f32.mrb[0].mxu0
    %v108 = vadd.f32 0.0, %v107
    %v109 = vpop.f32.mrb[0].mxu0
    %110 = vmatprep.mubr.f32.mxu0 0.0
    %111 = vmatmul.mubr.f32.gmra.mrb[0].mxu0 %v39
    %v112 = vpop.f32.mrb[0].mxu0
    %v113 = vadd.f32 0.0, %v112
    %v114 = vpop.f32.mrb[0].mxu0
    %115 = vdwg.mxu0
    %p116 = scmp.eq.s32.totalorder 0, 0
    // Predicated region
    $region18: #{self_attention_forward.3} parent=1 // pred_check
      %p117 = pneg %p116
    $region19: #{self_attention_forward.3} parent=1 // pred_check_branch
      %119 = sbr.rel (%p117) target = $region21
    $region20: #{self_attention_forward.3} parent=1 // pred_region
      %v120 = vld [vmem:[%s2] sm:$0x1]
      %v122 = vlaneseq
      %v123 = vshrl.u32 %v122, 7
      %v124 = vsub.s32 0, %v123
      %v125 = vrot.slane %v120, %v124
      %v127 = vadd.f32 %v108, %v125
      %v128 = vadd.f32 %v113, %v125
      %vm129 = vcmask 785408
      %130 = vst.msk [vmem:[%s3] sm:$0xff] %vm129, %v127
      %131 = vst.msk [vmem:[%s3 + $0x8] sm:$0xff] %vm129, %v128
    $region21: #{self_attention_forward.3} parent=1 // pred_fallthru
      _
    %p132 = scmp.ne.s32.totalorder 0, 0
    // Predicated region
    $region22: #{self_attention_forward.3} parent=1 // pred_check
      %p133 = pneg %p132
    $region23: #{self_attention_forward.3} parent=1 // pred_check_branch
      %135 = sbr.rel (%p133) target = $region25
    $region24: #{self_attention_forward.3} parent=1 // pred_region
      %v136 = vld [vmem:[%s3] sm:$0xff]
      %v137 = vld [vmem:[%s3 + $0x8] sm:$0xff]
      %v138 = vadd.f32 %v136, %v108
      %v139 = vadd.f32 %v137, %v113
      %vm140 = vcmask 785408
      %141 = vst.msk [vmem:[%s3] sm:$0xff] %vm140, %v138
      %142 = vst.msk [vmem:[%s3 + $0x8] sm:$0xff] %vm140, %v139
    $region25: #{self_attention_forward.3} parent=1 // pred_fallthru
      _
    // Predicated region
    $region26: #{self_attention_forward.3} parent=1 // pred_check
      _
    $region27: #{self_attention_forward.3} parent=1 // pred_check_branch
      %144 = sbr.rel (0) target = $region29
    $region28: #{self_attention_forward.3} parent=1 // pred_region
      _
    $region29: #{self_attention_forward.3} parent=1 // pred_fallthru
      _
    // Predicated region
    $region30: #{self_attention_forward.3} parent=1 // pred_check
      _
    $region31: #{self_attention_forward.3} parent=1 // pred_check_branch
      %146 = sbr.rel (0) target = $region33
    $region32: #{self_attention_forward.3} parent=1 // pred_region
      _
    $region33: #{self_attention_forward.3} parent=1 // pred_fallthru
      _
    %147 = vsyncpa [#allocation3], 1

// kernel: self_attention_forward.5
$region0: #{self_attention_forward.5}
  #allocation0 [shape = 'u32[]', space=smem, size = 0x4, offset = 0x4, fixed_abs, tag = 'smem constant byte address 0x4 - core index']
  #allocation1 [shape = 'u32[144,128]{1,0:T(1,128)}', space=vmem, size = 0x12000, scoped, tag = 'internal scratch']
  %s0 = inlined_call_operand.vmem [shape: f32[16,32], index: 0, kind: input, shape index: {}]
  %s1 = inlined_call_operand.vmem [shape: f32[32,32], index: 1, kind: input, shape index: {}]
  %s2 = inlined_call_operand.vmem [shape: f32[1,32], index: 2, kind: input, shape index: {}]
  %s3 = inlined_call_operand.hbm [shape: f32[16,32], index: 3, kind: output, shape index: {}]
  %s4 = sld [smem:[#allocation0]]
  $region30: #{self_attention_forward.5} parent=0
    _
  %s6 = ssub.s32 1, %s4
  %s7 = scalar_select 0, %s6, %s4
  $region1: #{self_attention_forward.5} parent=0
    #allocation2 [shape = 'u8[8192]{0}', space=vmem, size = 0x2000, scoped, tag = 'output window, operand 0, single buffered']
    #allocation3 [shape = 's32[1]{0}', space=sflag, size = 0x4, scoped, tag = 'scoped memory for self_attention_forward.5']
    %8 = vsyncpa [#allocation3], 0
    // Predicated region
    $region2: #{self_attention_forward.5} parent=1 // pred_check
      _
    $region3: #{self_attention_forward.5} parent=1 // pred_check_branch
      %10 = sbr.rel (0) target = $region5
    $region4: #{self_attention_forward.5} parent=1 // pred_region
      _
    $region5: #{self_attention_forward.5} parent=1 // pred_fallthru
      _
    // Predicated region
    $region6: #{self_attention_forward.5} parent=1 // pred_check
      _
    $region7: #{self_attention_forward.5} parent=1 // pred_check_branch
      %12 = sbr.rel (0) target = $region9
    $region8: #{self_attention_forward.5} parent=1 // pred_region
      _
    $region9: #{self_attention_forward.5} parent=1 // pred_fallthru
      _
    // Predicated region
    $region10: #{self_attention_forward.5} parent=1 // pred_check
      _
    $region11: #{self_attention_forward.5} parent=1 // pred_check_branch
      %14 = sbr.rel (0) target = $region13
    $region12: #{self_attention_forward.5} parent=1 // pred_region
      _
    $region13: #{self_attention_forward.5} parent=1 // pred_fallthru
      _
    %v15 = vld [vmem:[%s0] sm:$0xff]
    %v16 = vld [vmem:[%s0 + $0x8] sm:$0xff]
    %v17 = vld [vmem:[%s1] sm:$0xff]
    %v18 = vld [vmem:[%s1 + $0x8] sm:$0xff]
    %v19 = vld [vmem:[%s1 + $0x10] sm:$0xff]
    %v20 = vld [vmem:[%s1 + $0x18] sm:$0xff]
    %vm21 = vcmask 261120
    %v23 = vsel %vm21, %v15, 0
    %v26 = vsel %vm21, %v16, 0
    %28 = vmatprep.subr.mxu0 0.0
    %29 = vmatpush1.msra.mxu0 %v17
    %30 = vmatprep.subr.mxu0 0.0
    %31 = vmatpush1.msra.mxu0 %v18
    %32 = vmatprep.subr.mxu0 0.0
    %33 = vmatpush1.msra.mxu0 %v19
    %34 = vmatprep.subr.mxu0 0.0
    %35 = vmatpush1.msra.mxu0 %v20
    %36 = vmatprep.subr.mxu0 0.0
    %37 = vmatpush1.msra.mxu0 0.0
    %38 = vmatprep.subr.mxu0 0.0
    %39 = vmatpush1.msra.mxu0 0.0
    %40 = vmatprep.subr.mxu0 0.0
    %41 = vmatpush1.msra.mxu0 0.0
    %42 = vmatprep.subr.mxu0 0.0
    %43 = vmatpush1.msra.mxu0 0.0
    %44 = vmatprep.subr.mxu0 0.0
    %45 = vmatpush1.msra.mxu0 0.0
    %46 = vmatprep.subr.mxu0 0.0
    %47 = vmatpush1.msra.mxu0 0.0
    %48 = vmatprep.subr.mxu0 0.0
    %49 = vmatpush1.msra.mxu0 0.0
    %50 = vmatprep.subr.mxu0 0.0
    %51 = vmatpush1.msra.mxu0 0.0
    %52 = vmatprep.subr.mxu0 0.0
    %53 = vmatpush1.msra.mxu0 0.0
    %54 = vmatprep.subr.mxu0 0.0
    %55 = vmatpush1.msra.mxu0 0.0
    %56 = vmatprep.subr.mxu0 0.0
    %57 = vmatpush1.msra.mxu0 0.0
    %58 = vmatprep.subr.mxu0 0.0
    %59 = vmatpush1.msra.mxu0 0.0
    %60 = vmatprep.subr.mxu0 0.0
    %61 = vmatpush1.msra.mxu0 0.0
    %62 = vmatprep.subr.mxu0 0.0
    %63 = vmatpush1.msra.mxu0 0.0
    %64 = vmatprep.subr.mxu0 0.0
    %65 = vmatpush1.msra.mxu0 0.0
    %66 = vmatprep.subr.mxu0 0.0
    %67 = vmatpush1.msra.mxu0 0.0
    %68 = vmatprep.subr.mxu0 0.0
    %69 = vmatpush1.msra.mxu0 0.0
    %70 = vmatprep.subr.mxu0 0.0
    %71 = vmatpush1.msra.mxu0 0.0
    %72 = vmatprep.subr.mxu0 0.0
    %73 = vmatpush1.msra.mxu0 0.0
    %74 = vmatprep.subr.mxu0 0.0
    %75 = vmatpush1.msra.mxu0 0.0
    %76 = vmatprep.subr.mxu0 0.0
    %77 = vmatpush1.msra.mxu0 0.0
    %78 = vmatprep.subr.mxu0 0.0
    %79 = vmatpush1.msra.mxu0 0.0
    %80 = vmatprep.subr.mxu0 0.0
    %81 = vmatpush1.msra.mxu0 0.0
    %82 = vmatprep.subr.mxu0 0.0
    %83 = vmatpush1.msra.mxu0 0.0
    %84 = vmatprep.subr.mxu0 0.0
    %85 = vmatpush1.msra.mxu0 0.0
    %86 = vmatprep.subr.mxu0 0.0
    %87 = vmatpush1.msra.mxu0 0.0
    %88 = vmatprep.subr.mxu0 0.0
    %89 = vmatpush1.msra.mxu0 0.0
    %90 = vmatprep.subr.mxu0 0.0
    %91 = vmatpush1.msra.mxu0 0.0
    %92 = vmatprep.mubr.f32.mxu0 0.0
    %93 = vmatmul.mubr.f32.gmra.mrb[0].mxu0 %v23
    %v94 = vpop.f32.mrb[0].mxu0
    %v95 = vadd.f32 0.0, %v94
    %v96 = vpop.f32.mrb[0].mxu0
    %97 = vmatprep.mubr.f32.mxu0 0.0
    %98 = vmatmul.mubr.f32.gmra.mrb[0].mxu0 %v26
    %v99 = vpop.f32.mrb[0].mxu0
    %v100 = vadd.f32 0.0, %v99
    %v101 = vpop.f32.mrb[0].mxu0
    %102 = vdwg.mxu0
    %p103 = scmp.eq.s32.totalorder 0, 0
    // Predicated region
    $region14: #{self_attention_forward.5} parent=1 // pred_check
      %p104 = pneg %p103
    $region15: #{self_attention_forward.5} parent=1 // pred_check_branch
      %106 = sbr.rel (%p104) target = $region17
    $region16: #{self_attention_forward.5} parent=1 // pred_region
      %v107 = vld [vmem:[%s2] sm:$0x1]
      %v109 = vlaneseq
      %v110 = vshrl.u32 %v109, 7
      %v111 = vsub.s32 0, %v110
      %v112 = vrot.slane %v107, %v111
      %v114 = vadd.f32 %v95, %v112
      %v115 = vadd.f32 %v100, %v112
      %116 = vst.msk [vmem:[#allocation2] sm:$0xff] %vm21, %v114
      %117 = vst.msk [vmem:[#allocation2 + $0x8] sm:$0xff] %vm21, %v115
    $region17: #{self_attention_forward.5} parent=1 // pred_fallthru
      _
    %p118 = scmp.ne.s32.totalorder 0, 0
    // Predicated region
    $region18: #{self_attention_forward.5} parent=1 // pred_check
      %p119 = pneg %p118
    $region19: #{self_attention_forward.5} parent=1 // pred_check_branch
      %121 = sbr.rel (%p119) target = $region21
    $region20: #{self_attention_forward.5} parent=1 // pred_region
      %v122 = vld [vmem:[#allocation2] sm:$0xff]
      %v123 = vld [vmem:[#allocation2 + $0x8] sm:$0xff]
      %v124 = vadd.f32 %v122, %v95
      %v125 = vadd.f32 %v123, %v100
      %126 = vst.msk [vmem:[#allocation2] sm:$0xff] %vm21, %v124
      %127 = vst.msk [vmem:[#allocation2 + $0x8] sm:$0xff] %vm21, %v125
    $region21: #{self_attention_forward.5} parent=1 // pred_fallthru
      _
    // Predicated region
    $region22: #{self_attention_forward.5} parent=1 // pred_check
      _
    $region23: #{self_attention_forward.5} parent=1 // pred_check_branch
      %129 = sbr.rel (0) target = $region25
    $region24: #{self_attention_forward.5} parent=1 // pred_region
      %s131 = ssub.s32 256, 256
      %132 = vsyncadd [#allocation3], %s131
      %s133 = sshll.u32 [#allocation2], 4
      %s134 = int_to_ptr.vmem [resolvable:$true] %s133
      %139 = dma.vmem_to_hbm [thread:$0]  %s134, 256, %s3, [#allocation3], 128, 128, 8
    $region25: #{self_attention_forward.5} parent=1 // pred_fallthru
      _
    // Predicated region
    $region26: #{self_attention_forward.5} parent=1 // pred_check
      _
    $region27: #{self_attention_forward.5} parent=1 // pred_check_branch
      %141 = sbr.rel (0) target = $region29
    $region28: #{self_attention_forward.5} parent=1 // pred_region
      %142 = dma.done [#allocation3], 256
    $region29: #{self_attention_forward.5} parent=1 // pred_fallthru
      _
    %143 = vsyncpa [#allocation3], 1

// kernel: self_attention_forward.4
$region0: #{self_attention_forward.4}
  #allocation0 [shape = 'u32[]', space=smem, size = 0x4, offset = 0x4, fixed_abs, tag = 'smem constant byte address 0x4 - core index']
  #allocation1 [shape = 'u32[144,128]{1,0:T(1,128)}', space=vmem, size = 0x12000, scoped, tag = 'internal scratch']
  #allocation2 [shape = 'f32[8,1]{1,0:T(8,128)}', space=vmem, size = 0x1000, scoped, tag = 'scratch operand']
  #allocation3 [shape = 'f32[8,1]{1,0:T(8,128)}', space=vmem, size = 0x1000, scoped, tag = 'scratch operand']
  #allocation4 [shape = 'f32[8,8]{1,0:T(8,128)}', space=vmem, size = 0x1000, scoped, tag = 'scratch operand']
  #allocation5 [shape = 's32[1]{0}', space=sflag, size = 0x4, scoped, tag = 'scoped memory for self_attention_forward.4']
  #allocation6 [shape = 's32[1]{0:T(128)S(6)}', space=smem, size = 0x200, scoped, tag = 'prefetched SMEM operand 0']
  #allocation7 [shape = 's32[1]{0:T(128)S(6)}', space=smem, size = 0x200, scoped, tag = 'prefetched SMEM operand 1']
  #allocation8 [shape = 's32[1]{0:T(128)S(6)}', space=smem, size = 0x200, scoped, tag = 'prefetched SMEM operand 2']
  %s0 = inlined_call_operand.<no memory space> [shape: s32[1], index: 0, kind: input, shape index: {}, may-alias: {0,1}]
  %s1 = inlined_call_operand.<no memory space> [shape: s32[1], index: 1, kind: input, shape index: {}, may-alias: {0,1}]
  %s2 = inlined_call_operand.<no memory space> [shape: s32[1], index: 2, kind: input, shape index: {}]
  %s3 = inlined_call_operand.vmem [shape: f32[8,8,8], index: 3, kind: input, shape index: {}]
  %s4 = inlined_call_operand.vmem [shape: f32[8,8,8], index: 4, kind: input, shape index: {}]
  %s5 = inlined_call_operand.vmem [shape: f32[8,8,8], index: 5, kind: input, shape index: {}]
  %s6 = inlined_call_operand.vmem [shape: f32[8,8,8], index: 6, kind: output, shape index: {}]
  %s7 = sld [smem:[#allocation0]]
  $region61: #{self_attention_forward.4} parent=0
    _
  %s9 = ssub.s32 1, %s7
  %s10 = scalar_select 0, %s9, %s7
  %11 = sst [smem:[#allocation6]] %s0
  %12 = sst [smem:[#allocation7]] %s1
  %13 = sst [smem:[#allocation8]] %s2
  loop: start=0, step=1, limit=10
  $region2: #{self_attention_forward.4} parent=0 // loop_pre_header
    _
  $region3: #{self_attention_forward.4} parent=0 // loop_header
    %s15 = sphi 0, %s19
    %p16 = scmp.ge.s32.totalorder %s15, 10
    %s22 = sphi 0, %s34
    %s23 = sphi 0, %s30
    %s24 = sphi 0, %s22
    %s25 = sphi 0, %s23
    %s26 = sphi 0, %s24
    %s27 = sphi 0, %s25
    %s41 = sphi 0, %s43
    %s44 = sphi 0, %s41
    %s45 = sphi 0, %s44
    %s61 = sphi 0, %s45
    %s71 = sphi 0, %s73
    %s74 = sphi 0, %s71
    %s75 = sphi 0, %s74
    %s91 = sphi 0, %s75
    %s101 = sphi 0, %s103
    %s104 = sphi 0, %s101
    %s105 = sphi 0, %s104
    %s121 = sphi 0, %s105
    %s131 = sphi 0, %s133
    %s134 = sphi 0, %s131
    %s135 = sphi 0, %s134
    %s151 = sphi 0, %s135
  $region4: #{self_attention_forward.4} parent=0 // loop_header_branch
    %18 = sbr.rel (%p16) target = $region8
  $region5: #{self_attention_forward.4} parent=0 // loop_body
    %s20 = ssub.s32 %s15, 1
    %s21 = ssub.s32 %s15, 2
    %s28 = sadd.s32 1, %s23
    %p29 = scmp.ge.s32.totalorder %s28, 1
    %s30 = scalar_select %p29, 0, %s28
    %s31 = sadd.s32 1, %s22
    %s32 = scalar_select %p29, %s31, %s22
    %p33 = scmp.ge.s32.totalorder %s32, 8
    %s34 = scalar_select %p33, 0, %s32
    %s35 = sld [smem:[#allocation6 + %s23]]
    %s36 = sld [smem:[#allocation6 + %s30]]
    %s37 = ssub.s32 %s22, %s34
    %s38 = ssub.s32 %s35, %s36
    %s39 = sor.u32 %s37, %s38
    %p40 = scmp.eq.s32.totalorder %s39, 0
    %s42 = sadd.s32 %s41, 1
    %s43 = scalar_select %p40, %s41, %s42
    %p46 = pneg %p40
    %p47 = scmp.eq.s32.totalorder %s15, 7
    %p48 = por %p46, %p47
    %p49 = scmp.ne.s32.totalorder %s41, %s44
    %p50 = scmp.eq.s32.totalorder %s15, 0
    %p51 = por %p49, %p50
    %p52 = scmp.ne.s32.totalorder %s41, %s44
    %p53 = scmp.eq.s32.totalorder %s20, 7
    %p54 = por %p52, %p53
    %p55 = scmp.ne.s32.totalorder %s44, %s45
    %p56 = scmp.eq.s32.totalorder %s20, 0
    %p57 = por %p55, %p56
    %p58 = scmp.ne.s32.totalorder %s44, %s45
    %p59 = scmp.eq.s32.totalorder %s21, 7
    %p60 = por %p58, %p59
    %p62 = scmp.ne.s32.totalorder %s45, %s61
    %p63 = scmp.eq.s32.totalorder %s21, 0
    %p64 = por %p62, %p63
    %s65 = sld [smem:[#allocation7 + %s23]]
    %s66 = sld [smem:[#allocation7 + %s30]]
    %s67 = ssub.s32 %s22, %s34
    %s68 = ssub.s32 %s65, %s66
    %s69 = sor.u32 %s67, %s68
    %p70 = scmp.eq.s32.totalorder %s69, 0
    %s72 = sadd.s32 %s71, 1
    %s73 = scalar_select %p70, %s71, %s72
    %p76 = pneg %p70
    %p77 = scmp.eq.s32.totalorder %s15, 7
    %p78 = por %p76, %p77
    %p79 = scmp.ne.s32.totalorder %s71, %s74
    %p80 = scmp.eq.s32.totalorder %s15, 0
    %p81 = por %p79, %p80
    %p82 = scmp.ne.s32.totalorder %s71, %s74
    %p83 = scmp.eq.s32.totalorder %s20, 7
    %p84 = por %p82, %p83
    %p85 = scmp.ne.s32.totalorder %s74, %s75
    %p86 = scmp.eq.s32.totalorder %s20, 0
    %p87 = por %p85, %p86
    %p88 = scmp.ne.s32.totalorder %s74, %s75
    %p89 = scmp.eq.s32.totalorder %s21, 7
    %p90 = por %p88, %p89
    %p92 = scmp.ne.s32.totalorder %s75, %s91
    %p93 = scmp.eq.s32.totalorder %s21, 0
    %p94 = por %p92, %p93
    %s95 = sld [smem:[#allocation7 + %s23]]
    %s96 = sld [smem:[#allocation7 + %s30]]
    %s97 = ssub.s32 %s22, %s34
    %s98 = ssub.s32 %s95, %s96
    %s99 = sor.u32 %s97, %s98
    %p100 = scmp.eq.s32.totalorder %s99, 0
    %s102 = sadd.s32 %s101, 1
    %s103 = scalar_select %p100, %s101, %s102
    %p106 = pneg %p100
    %p107 = scmp.eq.s32.totalorder %s15, 7
    %p108 = por %p106, %p107
    %p109 = scmp.ne.s32.totalorder %s101, %s104
    %p110 = scmp.eq.s32.totalorder %s15, 0
    %p111 = por %p109, %p110
    %p112 = scmp.ne.s32.totalorder %s101, %s104
    %p113 = scmp.eq.s32.totalorder %s20, 7
    %p114 = por %p112, %p113
    %p115 = scmp.ne.s32.totalorder %s104, %s105
    %p116 = scmp.eq.s32.totalorder %s20, 0
    %p117 = por %p115, %p116
    %p118 = scmp.ne.s32.totalorder %s104, %s105
    %p119 = scmp.eq.s32.totalorder %s21, 7
    %p120 = por %p118, %p119
    %p122 = scmp.ne.s32.totalorder %s105, %s121
    %p123 = scmp.eq.s32.totalorder %s21, 0
    %p124 = por %p122, %p123
    %s125 = sld [smem:[#allocation6 + %s23]]
    %s126 = sld [smem:[#allocation6 + %s30]]
    %s127 = ssub.s32 %s22, %s34
    %s128 = ssub.s32 %s125, %s126
    %s129 = sor.u32 %s127, %s128
    %p130 = scmp.eq.s32.totalorder %s129, 0
    %s132 = sadd.s32 %s131, 1
    %s133 = scalar_select %p130, %s131, %s132
    %p136 = pneg %p130
    %p137 = scmp.eq.s32.totalorder %s15, 7
    %p138 = por %p136, %p137
    %p139 = scmp.ne.s32.totalorder %s131, %s134
    %p140 = scmp.eq.s32.totalorder %s15, 0
    %p141 = por %p139, %p140
    %p142 = scmp.ne.s32.totalorder %s131, %s134
    %p143 = scmp.eq.s32.totalorder %s20, 7
    %p144 = por %p142, %p143
    %p145 = scmp.ne.s32.totalorder %s134, %s135
    %p146 = scmp.eq.s32.totalorder %s20, 0
    %p147 = por %p145, %p146
    %p148 = scmp.ne.s32.totalorder %s134, %s135
    %p149 = scmp.eq.s32.totalorder %s21, 7
    %p150 = por %p148, %p149
    %p152 = scmp.ne.s32.totalorder %s135, %s151
    %p153 = scmp.eq.s32.totalorder %s21, 0
    %p154 = por %p152, %p153
    %p155 = scmp.le.s32.totalorder 1, %s15
    %p156 = scmp.lt.s32.totalorder %s15, 9
    %p157 = pnand %p155, %p156
    %p158 = pneg %p157
    // Predicated region
    $region9: #{self_attention_forward.4} parent=5 // pred_check
      _
    $region10: #{self_attention_forward.4} parent=5 // pred_check_branch
      %160 = sbr.rel (%p157) target = $region12
    $region11: #{self_attention_forward.4} parent=5 // pred_region
      %s161 = ssub.s32 %s15, 1
    $region12: #{self_attention_forward.4} parent=5 // pred_fallthru
      _
    %p162 = scmp.lt.s32.totalorder %s15, 8
    // Predicated region
    $region13: #{self_attention_forward.4} parent=5 // pred_check
      %p163 = pneg %p162
    $region14: #{self_attention_forward.4} parent=5 // pred_check_branch
      %165 = sbr.rel (%p163) target = $region16
    $region15: #{self_attention_forward.4} parent=5 // pred_region
      // Predicated region
      $region17: #{self_attention_forward.4} parent=15 // pred_check
        %p166 = pneg %p51
      $region18: #{self_attention_forward.4} parent=15 // pred_check_branch
        %168 = sbr.rel (%p166) target = $region20
      $region19: #{self_attention_forward.4} parent=15 // pred_region
        %s169 = sld [smem:[#allocation6 + %s23]]
        %p170 = scmp.lt.s32.totalorder %s22, 7
        %s171 = scalar_select %p170, %s22, 7
        %p172 = scmp.lt.s32.totalorder %s169, 0
        %s173 = scalar_select %p172, %s169, 0
        %s174 = sadd.s32 %s173, %s171
        %s175 = smul.addr %s174, 8
        %s176 = scalar_lea.vmem %s3, %s175
        %s177 = sld [smem:[#allocation6 + %s23]]
      $region20: #{self_attention_forward.4} parent=15 // pred_fallthru
        _
      // Predicated region
      $region21: #{self_attention_forward.4} parent=15 // pred_check
        %p178 = pneg %p81
      $region22: #{self_attention_forward.4} parent=15 // pred_check_branch
        %180 = sbr.rel (%p178) target = $region24
      $region23: #{self_attention_forward.4} parent=15 // pred_region
        %s181 = sld [smem:[#allocation7 + %s23]]
        %p182 = scmp.lt.s32.totalorder %s22, 7
        %s183 = scalar_select %p182, %s22, 7
        %p184 = scmp.lt.s32.totalorder %s181, 0
        %s185 = scalar_select %p184, %s181, 0
        %s186 = sadd.s32 %s185, %s183
        %s187 = smul.addr %s186, 8
        %s188 = scalar_lea.vmem %s4, %s187
        %s189 = sld [smem:[#allocation7 + %s23]]
      $region24: #{self_attention_forward.4} parent=15 // pred_fallthru
        _
      // Predicated region
      $region25: #{self_attention_forward.4} parent=15 // pred_check
        %p190 = pneg %p111
      $region26: #{self_attention_forward.4} parent=15 // pred_check_branch
        %192 = sbr.rel (%p190) target = $region28
      $region27: #{self_attention_forward.4} parent=15 // pred_region
        %s193 = sld [smem:[#allocation7 + %s23]]
        %p194 = scmp.lt.s32.totalorder %s22, 7
        %s195 = scalar_select %p194, %s22, 7
        %p196 = scmp.lt.s32.totalorder %s193, 0
        %s197 = scalar_select %p196, %s193, 0
        %s198 = sadd.s32 %s197, %s195
        %s199 = smul.addr %s198, 8
        %s200 = scalar_lea.vmem %s5, %s199
        %s201 = sld [smem:[#allocation7 + %s23]]
      $region28: #{self_attention_forward.4} parent=15 // pred_fallthru
        _
    $region16: #{self_attention_forward.4} parent=5 // pred_fallthru
      _
    %p202 = scmp.le.s32.totalorder 1, %s15
    %p203 = scmp.lt.s32.totalorder %s15, 9
    %p204 = pnand %p202, %p203
    %p205 = pneg %p204
    // Predicated region
    $region29: #{self_attention_forward.4} parent=5 // pred_check
      _
    $region30: #{self_attention_forward.4} parent=5 // pred_check_branch
      %207 = sbr.rel (%p204) target = $region32
    $region31: #{self_attention_forward.4} parent=5 // pred_region
      %s208 = ssub.s32 %s15, 1
      %s209 = sld [smem:[#allocation6 + %s25]]
      %p210 = scmp.lt.s32.totalorder %s24, 7
      %s211 = scalar_select %p210, %s24, 7
      %p212 = scmp.lt.s32.totalorder %s209, 0
      %s213 = scalar_select %p212, %s209, 0
      %s214 = sadd.s32 %s213, %s211
      %s215 = smul.addr %s214, 8
      %s216 = scalar_lea.vmem %s3, %s215
      %p217 = pneg %p57
      %p218 = pneg %p54
      %s219 = sld [smem:[#allocation7 + %s25]]
      %p220 = scmp.lt.s32.totalorder %s24, 7
      %s221 = scalar_select %p220, %s24, 7
      %p222 = scmp.lt.s32.totalorder %s219, 0
      %s223 = scalar_select %p222, %s219, 0
      %s224 = sadd.s32 %s223, %s221
      %s225 = smul.addr %s224, 8
      %s226 = scalar_lea.vmem %s4, %s225
      %p227 = pneg %p87
      %p228 = pneg %p84
      %s229 = sld [smem:[#allocation7 + %s25]]
      %p230 = scmp.lt.s32.totalorder %s24, 7
      %s231 = scalar_select %p230, %s24, 7
      %p232 = scmp.lt.s32.totalorder %s229, 0
      %s233 = scalar_select %p232, %s229, 0
      %s234 = sadd.s32 %s233, %s231
      %s235 = smul.addr %s234, 8
      %s236 = scalar_lea.vmem %s5, %s235
      %p237 = pneg %p117
      %p238 = pneg %p114
      %p239 = pneg %p147
      %p240 = pneg %p144
      %s241 = sld [smem:[#allocation6 + %s25]]
      %p242 = scmp.lt.s32.totalorder %s24, 7
      %s243 = scalar_select %p242, %s24, 7
      %p244 = scmp.lt.s32.totalorder %s241, 0
      %s245 = scalar_select %p244, %s241, 0
      %s246 = sadd.s32 %s245, %s243
      %s247 = smul.addr %s246, 8
      %s248 = scalar_lea.vmem %s6, %s247
      %s249 = sld [smem:[#allocation6 + %s25]]
      %p250 = scmp.lt.s32.totalorder %s24, 7
      %s251 = scalar_select %p250, %s24, 7
      %p252 = scmp.lt.s32.totalorder %s249, 0
      %s253 = scalar_select %p252, %s249, 0
      %s254 = sadd.s32 %s253, %s251
      %s255 = smul.addr %s254, 8
      %s256 = scalar_lea.vmem %s3, %s255
      %s257 = sld [smem:[#allocation6 + %s25]]
      %s258 = sld [smem:[#allocation7 + %s25]]
      %p259 = scmp.lt.s32.totalorder %s24, 7
      %s260 = scalar_select %p259, %s24, 7
      %p261 = scmp.lt.s32.totalorder %s258, 0
      %s262 = scalar_select %p261, %s258, 0
      %s263 = sadd.s32 %s262, %s260
      %s264 = smul.addr %s263, 8
      %s265 = scalar_lea.vmem %s4, %s264
      %s266 = sld [smem:[#allocation7 + %s25]]
      %s267 = sld [smem:[#allocation7 + %s25]]
      %p268 = scmp.lt.s32.totalorder %s24, 7
      %s269 = scalar_select %p268, %s24, 7
      %p270 = scmp.lt.s32.totalorder %s267, 0
      %s271 = scalar_select %p270, %s267, 0
      %s272 = sadd.s32 %s271, %s269
      %s273 = smul.addr %s272, 8
      %s274 = scalar_lea.vmem %s5, %s273
      %s275 = sld [smem:[#allocation7 + %s25]]
      %s276 = sld [smem:[#allocation6 + %s25]]
      %p277 = scmp.lt.s32.totalorder %s24, 7
      %s278 = scalar_select %p277, %s24, 7
      %p279 = scmp.lt.s32.totalorder %s276, 0
      %s280 = scalar_select %p279, %s276, 0
      %s281 = sadd.s32 %s280, %s278
      %s282 = smul.addr %s281, 8
      %s283 = scalar_lea.vmem %s6, %s282
      %s284 = sld [smem:[#allocation6 + %s25]]
      %s285 = sld [smem:[#allocation6 + %s25]]
      %s286 = sld [smem:[#allocation7 + %s25]]
      %s287 = smul.u32 %s285, 8
      %s288 = smul.u32 %s286, 8
      %p289 = scmp.eq.s32.totalorder %s286, 0
      // Predicated region
      $region33: #{self_attention_forward.4} parent=31 // pred_check
        %p290 = pneg %p289
      $region34: #{self_attention_forward.4} parent=31 // pred_check_branch
        %292 = sbr.rel (%p290) target = $region36
      $region35: #{self_attention_forward.4} parent=31 // pred_region
        %vm293 = vcmask 7168
        %294 = vst.msk [vmem:[#allocation2] sm:$0xff] %vm293, -inf
        %295 = vst.msk [vmem:[#allocation3] sm:$0xff] %vm293, 0.0
        %vm296 = vcmask 64512
        %297 = vst.msk [vmem:[#allocation4] sm:$0xff] %vm296, 0.0
      $region36: #{self_attention_forward.4} parent=31 // pred_fallthru
        _
      %s298 = sadd.s32 %s288, 7
      %p299 = scmp.gt.s32.totalorder %s298, %s287
      // Predicated region
      $region37: #{self_attention_forward.4} parent=31 // pred_check
        %p300 = pneg %p299
      $region38: #{self_attention_forward.4} parent=31 // pred_check_branch
        %302 = sbr.rel (%p300) target = $region40
      $region39: #{self_attention_forward.4} parent=31 // pred_region
        %v303 = vld [vmem:[%s256] sm:$0xff]
        %v304 = vmul.f32 %v303, 0.35355338
        %v305 = vld [vmem:[%s265] sm:$0xff]
        %vm306 = vcmask 64512
        %v308 = vsel %vm306, %v304, 0
        %v311 = vsel %vm306, %v305, 0
        %313 = vmatprep.subr.mxu0 0.0
        %314 = vmatpush1.xpose.msra.mxu0 %v311
        %315 = vmatprep.subr.mxu0 0.0
        %316 = vmatpush1.xpose.msra.mxu0 0.0
        %317 = vmatprep.subr.mxu0 0.0
        %318 = vmatpush1.xpose.msra.mxu0 0.0
        %319 = vmatprep.subr.mxu0 0.0
        %320 = vmatpush1.xpose.msra.mxu0 0.0
        %321 = vmatprep.subr.mxu0 0.0
        %322 = vmatpush1.xpose.msra.mxu0 0.0
        %323 = vmatprep.subr.mxu0 0.0
        %324 = vmatpush1.xpose.msra.mxu0 0.0
        %325 = vmatprep.subr.mxu0 0.0
        %326 = vmatpush1.xpose.msra.mxu0 0.0
        %327 = vmatprep.subr.mxu0 0.0
        %328 = vmatpush1.xpose.msra.mxu0 0.0
        %329 = vmatprep.subr.mxu0 0.0
        %330 = vmatpush1.xpose.msra.mxu0 0.0
        %331 = vmatprep.subr.mxu0 0.0
        %332 = vmatpush1.xpose.msra.mxu0 0.0
        %333 = vmatprep.subr.mxu0 0.0
        %334 = vmatpush1.xpose.msra.mxu0 0.0
        %335 = vmatprep.subr.mxu0 0.0
        %336 = vmatpush1.xpose.msra.mxu0 0.0
        %337 = vmatprep.subr.mxu0 0.0
        %338 = vmatpush1.xpose.msra.mxu0 0.0
        %339 = vmatprep.subr.mxu0 0.0
        %340 = vmatpush1.xpose.msra.mxu0 0.0
        %341 = vmatprep.subr.mxu0 0.0
        %342 = vmatpush1.xpose.msra.mxu0 0.0
        %343 = vmatprep.subr.mxu0 0.0
        %344 = vmatpush1.xpose.msra.mxu0 0.0
        %345 = vmatprep.subr.mxu0 0.0
        %346 = vmatpush1.xpose.msra.mxu0 0.0
        %347 = vmatprep.subr.mxu0 0.0
        %348 = vmatpush1.xpose.msra.mxu0 0.0
        %349 = vmatprep.subr.mxu0 0.0
        %350 = vmatpush1.xpose.msra.mxu0 0.0
        %351 = vmatprep.subr.mxu0 0.0
        %352 = vmatpush1.xpose.msra.mxu0 0.0
        %353 = vmatprep.subr.mxu0 0.0
        %354 = vmatpush1.xpose.msra.mxu0 0.0
        %355 = vmatprep.subr.mxu0 0.0
        %356 = vmatpush1.xpose.msra.mxu0 0.0
        %357 = vmatprep.subr.mxu0 0.0
        %358 = vmatpush1.xpose.msra.mxu0 0.0
        %359 = vmatprep.subr.mxu0 0.0
        %360 = vmatpush1.xpose.msra.mxu0 0.0
        %361 = vmatprep.subr.mxu0 0.0
        %362 = vmatpush1.xpose.msra.mxu0 0.0
        %363 = vmatprep.subr.mxu0 0.0
        %364 = vmatpush1.xpose.msra.mxu0 0.0
        %365 = vmatprep.subr.mxu0 0.0
        %366 = vmatpush1.xpose.msra.mxu0 0.0
        %367 = vmatprep.subr.mxu0 0.0
        %368 = vmatpush1.xpose.msra.mxu0 0.0
        %369 = vmatprep.subr.mxu0 0.0
        %370 = vmatpush1.xpose.msra.mxu0 0.0
        %371 = vmatprep.subr.mxu0 0.0
        %372 = vmatpush1.xpose.msra.mxu0 0.0
        %373 = vmatprep.subr.mxu0 0.0
        %374 = vmatpush1.xpose.msra.mxu0 0.0
        %375 = vmatprep.subr.mxu0 0.0
        %376 = vmatpush1.xpose.msra.mxu0 0.0
        %377 = vmatprep.mubr.f32.mxu0 0.0
        %378 = vmatmul.mubr.f32.gmra.mrb[0].mxu0 %v308
        %v379 = vpop.f32.mrb[0].mxu0
        %v380 = vadd.f32 0.0, %v379
        %v381 = vpop.f32.mrb[0].mxu0
        %382 = vdwg.mxu0
        %v383 = vlaneseq
        %v384 = vshrl.u32 %v383, 7
        %v385 = vstv %s287
        %v386 = vadd.s32 %v385, %v384
        %v387 = vlaneseq
        %v388 = vand.u32 %v387, 127
        %v389 = vstv %s288
        %v390 = vadd.s32 %v389, %v388
        %vm391 = vcmp.gt.s32.totalorder %v390, %v386
        %v392 = vsel %vm391, -inf, %v380
        %v393 = vld [vmem:[%s274] sm:$0xff]
        %v394 = vld [vmem:[#allocation2] sm:$0xff]
        %v395 = vsel %vm306, %v392, -inf
        %396 = vmax.xlane.f32.xlu0 %v395
        %v397 = vpop.xlane.xlu0 %396
        %v398 = vmax.f32 %v394, %v397
        %v399 = vsub.f32 %v394, %v398
        %v400 = vmul.f32 %v399, 1.442695
        %v401 = vpow.pop %v400
        %403 = vset.pattern.permute.xlu0 0
        %404 = vperm.xlu0 %403, %v398
        %v405 = vpop.permute.xlu0 %404
        %v407 = vsub.f32 %v392, %v405
        %v408 = vmul.f32 %v407, 1.442695
        %v409 = vpow.pop %v408
        %v410 = vld [vmem:[#allocation3] sm:$0xff]
        %v411 = vmul.f32 %v401, %v410
        %v412 = vsel %vm306, %v409, 0.0
        %413 = vadd.xlane.f32.xlu0 %v412
        %v414 = vpop.xlane.xlu0 %413
        %v415 = vadd.f32 %v411, %v414
        %vm416 = vcmask 7168
        %417 = vst.msk [vmem:[#allocation3] sm:$0xff] %vm416, %v415
        %v418 = vld [vmem:[#allocation4] sm:$0xff]
        %420 = vset.pattern.permute.xlu0 0
        %421 = vperm.xlu0 %420, %v401
        %v422 = vpop.permute.xlu0 %421
        %v424 = vmul.f32 %v422, %v418
        %v426 = vsel %vm306, %v409, 0
        %428 = vmatprep.subr.mxu0 0.0
        %429 = vmatpush1.msra.mxu0 %v393
        %430 = vmatprep.subr.mxu0 0.0
        %431 = vmatpush1.msra.mxu0 0.0
        %432 = vmatprep.subr.mxu0 0.0
        %433 = vmatpush1.msra.mxu0 0.0
        %434 = vmatprep.subr.mxu0 0.0
        %435 = vmatpush1.msra.mxu0 0.0
        %436 = vmatprep.subr.mxu0 0.0
        %437 = vmatpush1.msra.mxu0 0.0
        %438 = vmatprep.subr.mxu0 0.0
        %439 = vmatpush1.msra.mxu0 0.0
        %440 = vmatprep.subr.mxu0 0.0
        %441 = vmatpush1.msra.mxu0 0.0
        %442 = vmatprep.subr.mxu0 0.0
        %443 = vmatpush1.msra.mxu0 0.0
        %444 = vmatprep.subr.mxu0 0.0
        %445 = vmatpush1.msra.mxu0 0.0
        %446 = vmatprep.subr.mxu0 0.0
        %447 = vmatpush1.msra.mxu0 0.0
        %448 = vmatprep.subr.mxu0 0.0
        %449 = vmatpush1.msra.mxu0 0.0
        %450 = vmatprep.subr.mxu0 0.0
        %451 = vmatpush1.msra.mxu0 0.0
        %452 = vmatprep.subr.mxu0 0.0
        %453 = vmatpush1.msra.mxu0 0.0
        %454 = vmatprep.subr.mxu0 0.0
        %455 = vmatpush1.msra.mxu0 0.0
        %456 = vmatprep.subr.mxu0 0.0
        %457 = vmatpush1.msra.mxu0 0.0
        %458 = vmatprep.subr.mxu0 0.0
        %459 = vmatpush1.msra.mxu0 0.0
        %460 = vmatprep.subr.mxu0 0.0
        %461 = vmatpush1.msra.mxu0 0.0
        %462 = vmatprep.subr.mxu0 0.0
        %463 = vmatpush1.msra.mxu0 0.0
        %464 = vmatprep.subr.mxu0 0.0
        %465 = vmatpush1.msra.mxu0 0.0
        %466 = vmatprep.subr.mxu0 0.0
        %467 = vmatpush1.msra.mxu0 0.0
        %468 = vmatprep.subr.mxu0 0.0
        %469 = vmatpush1.msra.mxu0 0.0
        %470 = vmatprep.subr.mxu0 0.0
        %471 = vmatpush1.msra.mxu0 0.0
        %472 = vmatprep.subr.mxu0 0.0
        %473 = vmatpush1.msra.mxu0 0.0
        %474 = vmatprep.subr.mxu0 0.0
        %475 = vmatpush1.msra.mxu0 0.0
        %476 = vmatprep.subr.mxu0 0.0
        %477 = vmatpush1.msra.mxu0 0.0
        %478 = vmatprep.subr.mxu0 0.0
        %479 = vmatpush1.msra.mxu0 0.0
        %480 = vmatprep.subr.mxu0 0.0
        %481 = vmatpush1.msra.mxu0 0.0
        %482 = vmatprep.subr.mxu0 0.0
        %483 = vmatpush1.msra.mxu0 0.0
        %484 = vmatprep.subr.mxu0 0.0
        %485 = vmatpush1.msra.mxu0 0.0
        %486 = vmatprep.subr.mxu0 0.0
        %487 = vmatpush1.msra.mxu0 0.0
        %488 = vmatprep.subr.mxu0 0.0
        %489 = vmatpush1.msra.mxu0 0.0
        %490 = vmatprep.subr.mxu0 0.0
        %491 = vmatpush1.msra.mxu0 0.0
        %492 = vmatprep.mubr.f32.mxu0 0.0
        %493 = vmatmul.mubr.f32.gmra.mrb[0].mxu0 %v426
        %v494 = vpop.f32.mrb[0].mxu0
        %v495 = vadd.f32 0.0, %v494
        %v496 = vpop.f32.mrb[0].mxu0
        %497 = vdwg.mxu0
        %v498 = vadd.f32 %v424, %v495
        %499 = vst.msk [vmem:[#allocation4] sm:$0xff] %vm306, %v498
        %500 = vst.msk [vmem:[#allocation2] sm:$0xff] %vm416, %v398
      $region40: #{self_attention_forward.4} parent=31 // pred_fallthru
        _
      %p501 = scmp.le.s32.totalorder %s298, %s287
      // Predicated region
      $region41: #{self_attention_forward.4} parent=31 // pred_check
        %p502 = pneg %p501
      $region42: #{self_attention_forward.4} parent=31 // pred_check_branch
        %504 = sbr.rel (%p502) target = $region44
      $region43: #{self_attention_forward.4} parent=31 // pred_region
        %v505 = vld [vmem:[%s256] sm:$0xff]
        %v506 = vmul.f32 %v505, 0.35355338
        %v507 = vld [vmem:[%s265] sm:$0xff]
        %vm508 = vcmask 64512
        %v510 = vsel %vm508, %v506, 0
        %v513 = vsel %vm508, %v507, 0
        %515 = vmatprep.subr.mxu0 0.0
        %516 = vmatpush1.xpose.msra.mxu0 %v513
        %517 = vmatprep.subr.mxu0 0.0
        %518 = vmatpush1.xpose.msra.mxu0 0.0
        %519 = vmatprep.subr.mxu0 0.0
        %520 = vmatpush1.xpose.msra.mxu0 0.0
        %521 = vmatprep.subr.mxu0 0.0
        %522 = vmatpush1.xpose.msra.mxu0 0.0
        %523 = vmatprep.subr.mxu0 0.0
        %524 = vmatpush1.xpose.msra.mxu0 0.0
        %525 = vmatprep.subr.mxu0 0.0
        %526 = vmatpush1.xpose.msra.mxu0 0.0
        %527 = vmatprep.subr.mxu0 0.0
        %528 = vmatpush1.xpose.msra.mxu0 0.0
        %529 = vmatprep.subr.mxu0 0.0
        %530 = vmatpush1.xpose.msra.mxu0 0.0
        %531 = vmatprep.subr.mxu0 0.0
        %532 = vmatpush1.xpose.msra.mxu0 0.0
        %533 = vmatprep.subr.mxu0 0.0
        %534 = vmatpush1.xpose.msra.mxu0 0.0
        %535 = vmatprep.subr.mxu0 0.0
        %536 = vmatpush1.xpose.msra.mxu0 0.0
        %537 = vmatprep.subr.mxu0 0.0
        %538 = vmatpush1.xpose.msra.mxu0 0.0
        %539 = vmatprep.subr.mxu0 0.0
        %540 = vmatpush1.xpose.msra.mxu0 0.0
        %541 = vmatprep.subr.mxu0 0.0
        %542 = vmatpush1.xpose.msra.mxu0 0.0
        %543 = vmatprep.subr.mxu0 0.0
        %544 = vmatpush1.xpose.msra.mxu0 0.0
        %545 = vmatprep.subr.mxu0 0.0
        %546 = vmatpush1.xpose.msra.mxu0 0.0
        %547 = vmatprep.subr.mxu0 0.0
        %548 = vmatpush1.xpose.msra.mxu0 0.0
        %549 = vmatprep.subr.mxu0 0.0
        %550 = vmatpush1.xpose.msra.mxu0 0.0
        %551 = vmatprep.subr.mxu0 0.0
        %552 = vmatpush1.xpose.msra.mxu0 0.0
        %553 = vmatprep.subr.mxu0 0.0
        %554 = vmatpush1.xpose.msra.mxu0 0.0
        %555 = vmatprep.subr.mxu0 0.0
        %556 = vmatpush1.xpose.msra.mxu0 0.0
        %557 = vmatprep.subr.mxu0 0.0
        %558 = vmatpush1.xpose.msra.mxu0 0.0
        %559 = vmatprep.subr.mxu0 0.0
        %560 = vmatpush1.xpose.msra.mxu0 0.0
        %561 = vmatprep.subr.mxu0 0.0
        %562 = vmatpush1.xpose.msra.mxu0 0.0
        %563 = vmatprep.subr.mxu0 0.0
        %564 = vmatpush1.xpose.msra.mxu0 0.0
        %565 = vmatprep.subr.mxu0 0.0
        %566 = vmatpush1.xpose.msra.mxu0 0.0
        %567 = vmatprep.subr.mxu0 0.0
        %568 = vmatpush1.xpose.msra.mxu0 0.0
        %569 = vmatprep.subr.mxu0 0.0
        %570 = vmatpush1.xpose.msra.mxu0 0.0
        %571 = vmatprep.subr.mxu0 0.0
        %572 = vmatpush1.xpose.msra.mxu0 0.0
        %573 = vmatprep.subr.mxu0 0.0
        %574 = vmatpush1.xpose.msra.mxu0 0.0
        %575 = vmatprep.subr.mxu0 0.0
        %576 = vmatpush1.xpose.msra.mxu0 0.0
        %577 = vmatprep.subr.mxu0 0.0
        %578 = vmatpush1.xpose.msra.mxu0 0.0
        %579 = vmatprep.mubr.f32.mxu0 0.0
        %580 = vmatmul.mubr.f32.gmra.mrb[0].mxu0 %v510
        %v581 = vpop.f32.mrb[0].mxu0
        %v582 = vadd.f32 0.0, %v581
        %v583 = vpop.f32.mrb[0].mxu0
        %584 = vdwg.mxu0
        %v585 = vld [vmem:[%s274] sm:$0xff]
        %v586 = vld [vmem:[#allocation2] sm:$0xff]
        %v587 = vsel %vm508, %v582, -inf
        %588 = vmax.xlane.f32.xlu0 %v587
        %v589 = vpop.xlane.xlu0 %588
        %v590 = vmax.f32 %v586, %v589
        %v591 = vsub.f32 %v586, %v590
        %v592 = vmul.f32 %v591, 1.442695
        %v593 = vpow.pop %v592
        %595 = vset.pattern.permute.xlu0 0
        %596 = vperm.xlu0 %595, %v590
        %v597 = vpop.permute.xlu0 %596
        %v599 = vsub.f32 %v582, %v597
        %v600 = vmul.f32 %v599, 1.442695
        %v601 = vpow.pop %v600
        %v602 = vld [vmem:[#allocation3] sm:$0xff]
        %v603 = vmul.f32 %v593, %v602
        %v604 = vsel %vm508, %v601, 0.0
        %605 = vadd.xlane.f32.xlu0 %v604
        %v606 = vpop.xlane.xlu0 %605
        %v607 = vadd.f32 %v603, %v606
        %vm608 = vcmask 7168
        %609 = vst.msk [vmem:[#allocation3] sm:$0xff] %vm608, %v607
        %v610 = vld [vmem:[#allocation4] sm:$0xff]
        %612 = vset.pattern.permute.xlu0 0
        %613 = vperm.xlu0 %612, %v593
        %v614 = vpop.permute.xlu0 %613
        %v616 = vmul.f32 %v614, %v610
        %v618 = vsel %vm508, %v601, 0
        %620 = vmatprep.subr.mxu0 0.0
        %621 = vmatpush1.msra.mxu0 %v585
        %622 = vmatprep.subr.mxu0 0.0
        %623 = vmatpush1.msra.mxu0 0.0
        %624 = vmatprep.subr.mxu0 0.0
        %625 = vmatpush1.msra.mxu0 0.0
        %626 = vmatprep.subr.mxu0 0.0
        %627 = vmatpush1.msra.mxu0 0.0
        %628 = vmatprep.subr.mxu0 0.0
        %629 = vmatpush1.msra.mxu0 0.0
        %630 = vmatprep.subr.mxu0 0.0
        %631 = vmatpush1.msra.mxu0 0.0
        %632 = vmatprep.subr.mxu0 0.0
        %633 = vmatpush1.msra.mxu0 0.0
        %634 = vmatprep.subr.mxu0 0.0
        %635 = vmatpush1.msra.mxu0 0.0
        %636 = vmatprep.subr.mxu0 0.0
        %637 = vmatpush1.msra.mxu0 0.0
        %638 = vmatprep.subr.mxu0 0.0
        %639 = vmatpush1.msra.mxu0 0.0
        %640 = vmatprep.subr.mxu0 0.0
        %641 = vmatpush1.msra.mxu0 0.0
        %642 = vmatprep.subr.mxu0 0.0
        %643 = vmatpush1.msra.mxu0 0.0
        %644 = vmatprep.subr.mxu0 0.0
        %645 = vmatpush1.msra.mxu0 0.0
        %646 = vmatprep.subr.mxu0 0.0
        %647 = vmatpush1.msra.mxu0 0.0
        %648 = vmatprep.subr.mxu0 0.0
        %649 = vmatpush1.msra.mxu0 0.0
        %650 = vmatprep.subr.mxu0 0.0
        %651 = vmatpush1.msra.mxu0 0.0
        %652 = vmatprep.subr.mxu0 0.0
        %653 = vmatpush1.msra.mxu0 0.0
        %654 = vmatprep.subr.mxu0 0.0
        %655 = vmatpush1.msra.mxu0 0.0
        %656 = vmatprep.subr.mxu0 0.0
        %657 = vmatpush1.msra.mxu0 0.0
        %658 = vmatprep.subr.mxu0 0.0
        %659 = vmatpush1.msra.mxu0 0.0
        %660 = vmatprep.subr.mxu0 0.0
        %661 = vmatpush1.msra.mxu0 0.0
        %662 = vmatprep.subr.mxu0 0.0
        %663 = vmatpush1.msra.mxu0 0.0
        %664 = vmatprep.subr.mxu0 0.0
        %665 = vmatpush1.msra.mxu0 0.0
        %666 = vmatprep.subr.mxu0 0.0
        %667 = vmatpush1.msra.mxu0 0.0
        %668 = vmatprep.subr.mxu0 0.0
        %669 = vmatpush1.msra.mxu0 0.0
        %670 = vmatprep.subr.mxu0 0.0
        %671 = vmatpush1.msra.mxu0 0.0
        %672 = vmatprep.subr.mxu0 0.0
        %673 = vmatpush1.msra.mxu0 0.0
        %674 = vmatprep.subr.mxu0 0.0
        %675 = vmatpush1.msra.mxu0 0.0
        %676 = vmatprep.subr.mxu0 0.0
        %677 = vmatpush1.msra.mxu0 0.0
        %678 = vmatprep.subr.mxu0 0.0
        %679 = vmatpush1.msra.mxu0 0.0
        %680 = vmatprep.subr.mxu0 0.0
        %681 = vmatpush1.msra.mxu0 0.0
        %682 = vmatprep.subr.mxu0 0.0
        %683 = vmatpush1.msra.mxu0 0.0
        %684 = vmatprep.mubr.f32.mxu0 0.0
        %685 = vmatmul.mubr.f32.gmra.mrb[0].mxu0 %v618
        %v686 = vpop.f32.mrb[0].mxu0
        %v687 = vadd.f32 0.0, %v686
        %v688 = vpop.f32.mrb[0].mxu0
        %689 = vdwg.mxu0
        %v690 = vadd.f32 %v616, %v687
        %691 = vst.msk [vmem:[#allocation4] sm:$0xff] %vm508, %v690
        %692 = vst.msk [vmem:[#allocation2] sm:$0xff] %vm608, %v590
      $region44: #{self_attention_forward.4} parent=31 // pred_fallthru
        _
      %s693 = sld [smem:[#allocation8 + %s25]]
      %p694 = scmp.eq.s32.totalorder %s693, 1
      // Predicated region
      $region45: #{self_attention_forward.4} parent=31 // pred_check
        %p695 = pneg %p694
      $region46: #{self_attention_forward.4} parent=31 // pred_check_branch
        %697 = sbr.rel (%p695) target = $region48
      $region47: #{self_attention_forward.4} parent=31 // pred_region
        %v698 = vld [vmem:[#allocation3] sm:$0xff]
        %v699 = vrcp.pop %v698
        %v700 = vld [vmem:[#allocation4] sm:$0xff]
        %702 = vset.pattern.permute.xlu0 0
        %703 = vperm.xlu0 %702, %v699
        %v704 = vpop.permute.xlu0 %703
        %v706 = vmul.f32 %v700, %v704
        %vm707 = vcmask 64512
        %708 = vst.msk [vmem:[%s283] sm:$0xff] %vm707, %v706
      $region48: #{self_attention_forward.4} parent=31 // pred_fallthru
        _
      %s709 = sld [smem:[#allocation6 + %s25]]
      %p710 = scmp.lt.s32.totalorder %s24, 7
      %s711 = scalar_select %p710, %s24, 7
      %p712 = scmp.lt.s32.totalorder %s709, 0
      %s713 = scalar_select %p712, %s709, 0
      %s714 = sadd.s32 %s713, %s711
      %s715 = smul.addr %s714, 8
      %s716 = scalar_lea.vmem %s6, %s715
      // Predicated region
      $region49: #{self_attention_forward.4} parent=31 // pred_check
        %p717 = pneg %p144
      $region50: #{self_attention_forward.4} parent=31 // pred_check_branch
        %719 = sbr.rel (%p717) target = $region52
      $region51: #{self_attention_forward.4} parent=31 // pred_region
        %s720 = sld [smem:[#allocation6 + %s25]]
      $region52: #{self_attention_forward.4} parent=31 // pred_fallthru
        _
    $region32: #{self_attention_forward.4} parent=5 // pred_fallthru
      _
    %p721 = scmp.le.s32.totalorder 2, %s15
    // Predicated region
    $region53: #{self_attention_forward.4} parent=5 // pred_check
      %p722 = pneg %p721
    $region54: #{self_attention_forward.4} parent=5 // pred_check_branch
      %724 = sbr.rel (%p722) target = $region56
    $region55: #{self_attention_forward.4} parent=5 // pred_region
      %s725 = ssub.s32 %s15, 2
      // Predicated region
      $region57: #{self_attention_forward.4} parent=55 // pred_check
        %p726 = pneg %p150
      $region58: #{self_attention_forward.4} parent=55 // pred_check_branch
        %728 = sbr.rel (%p726) target = $region60
      $region59: #{self_attention_forward.4} parent=55 // pred_region
        %s729 = sld [smem:[#allocation6 + %s27]]
        %p730 = scmp.lt.s32.totalorder %s26, 7
        %s731 = scalar_select %p730, %s26, 7
        %p732 = scmp.lt.s32.totalorder %s729, 0
        %s733 = scalar_select %p732, %s729, 0
        %s734 = sadd.s32 %s733, %s731
        %s735 = smul.addr %s734, 8
        %s736 = scalar_lea.vmem %s6, %s735
      $region60: #{self_attention_forward.4} parent=55 // pred_fallthru
        _
    $region56: #{self_attention_forward.4} parent=5 // pred_fallthru
      _
  $region6: #{self_attention_forward.4} parent=0 // loop_footer
    %s19 = sadd.s32 1, %s15
  $region7: #{self_attention_forward.4} parent=0 // loop_footer_branch
    %14 = sbr.rel target = $region3
  $region8: #{self_attention_forward.4} parent=0 // loop_exit
    _

</llo_original>
